<compile_context>
chip_gen: v6e
topology: v6e:2x2x1
jax: 0.10.0
libtpu: 0.0.40
codegen_flags: <defaults>
</compile_context>

<pallas_src>
import functools
import math

import jax
import jax.numpy as jnp
from jax import lax
from jax.experimental import pallas as pl
from jax.experimental.pallas import tpu as pltpu

# ---- small config consistent with GenPromptEmb / GPT-2 structure ----
D_MODEL = 32          # d_model (768 in the real module; small here)
N_HEAD = 4            # gpt2 n_head
HEAD_DIM = D_MODEL // N_HEAD
L_LAYER = 2           # l_layer (truncated gpt2.h)
D_FF = 4 * D_MODEL
VOCAB = 64
MAX_POS = 64
LN_EPS = 1e-5
MASK_PENALTY = -100.0  # _generate_mask writes -100 at language<->time_series pairs
NEG_MASK = -1e9        # causal / cross-segment "minus infinity" additive mask


def _layer_norm(x, g, b):
    mu = jnp.mean(x, axis=-1, keepdims=True)
    var = jnp.mean(jnp.square(x - mu), axis=-1, keepdims=True)
    return (x - mu) * lax.rsqrt(var + LN_EPS) * g + b


def _gelu_new(x):
    # GPT-2 "gelu_new" (tanh approximation), f32 (v5e-safe).
    c = math.sqrt(2.0 / math.pi)
    return 0.5 * x * (1.0 + jnp.tanh(c * (x + 0.044715 * x * x * x)))


def msk_fused_kernel(x_ref, mask_ref, small_ref, bqkv_ref, bfc_ref, lnf_ref,
                     wqkv_ref, wo_ref, wfc_ref, wpr_ref, out_ref,
                     qkv_scr, ctx_scr, *, n_head, head_dim, n_layer):
    """Whole MSK forward for the folded (GT ++ HD) sequence: L blocks + ln_f.

    x_ref    : (T, D)       f32  hidden state (wte + wpe), both sequences
    mask_ref : (T, T)       f32  block-diagonal additive mask (causal+calibrated)
    small_ref: (L, 6, D)    f32  [ln1_g, ln1_b, ln2_g, ln2_b, bo, bpr]
    bqkv_ref : (L, 1, 3D)   f32  fused c_attn bias, q part pre-scaled by 1/sqrt(hd)
    bfc_ref  : (L, 1, D_FF) f32
    lnf_ref  : (2, D)       f32  [lnf_g, lnf_b]
    wqkv_ref : (L, D, 3D)   bf16 fused c_attn weight, q columns pre-scaled
    wo_ref   : (L, D, D)    bf16 c_proj
    wfc_ref  : (L, D, D_FF) bf16 c_fc
    wpr_ref  : (L, D_FF, D) bf16 mlp c_proj
    qkv_scr  : (T, 3D)      f32  scratch
    ctx_scr  : (T, D)       f32  scratch
    """
    x = x_ref[...]                      # (T, D) f32
    mask = mask_ref[...]                # (T, T) additive mask
    T, D = x.shape

    for l in range(n_layer):            # static unroll over the truncated gpt2.h
        sp = small_ref[l]               # (6, D)

        # ---- attention (pre-LN) ----
        h1 = _layer_norm(x, sp[0:1], sp[1:2]).astype(jnp.bfloat16)        # (T, D)
        # One lane-dense fused QKV matmul; bias added in f32 (q already scaled).
        qkv_scr[...] = jnp.dot(h1, wqkv_ref[l],
                               preferred_element_type=jnp.float32) + bqkv_ref[l]

        for h in range(n_head):         # per-head score/PV math (static unroll)
            lo = h * head_dim
            hi = lo + head_dim
            q = qkv_scr[:, lo:hi].astype(jnp.bfloat16)                    # (T, hd)
            k = qkv_scr[:, D + lo:D + hi].astype(jnp.bfloat16)
            v = qkv_scr[:, 2 * D + lo:2 * D + hi].astype(jnp.bfloat16)

            s = jnp.einsum('qd,kd->qk', q, k,
                           preferred_element_type=jnp.float32) + mask     # (T, T)
            s = s - jnp.max(s, axis=-1, keepdims=True)
            p = jnp.exp(s)
            p = p * pl.reciprocal(jnp.sum(p, axis=-1, keepdims=True), approx=True)
            ctx = jnp.dot(p.astype(jnp.bfloat16), v,
                          preferred_element_type=jnp.float32)             # (T, hd)
            ctx_scr[:, lo:hi] = ctx     # flatten heads into (T, D) scratch

        # Fused output projection: one (T,D)@(D,D) matmul against un-split wo.
        attn_out = jnp.dot(ctx_scr[...].astype(jnp.bfloat16), wo_ref[l],
                           preferred_element_type=jnp.float32) + sp[4:5]  # (T, D)
        x = x + attn_out

        # ---- MLP (pre-LN) ----
        h2 = _layer_norm(x, sp[2:3], sp[3:4]).astype(jnp.bfloat16)
        fc = jnp.dot(h2, wfc_ref[l],
                     preferred_element_type=jnp.float32) + bfc_ref[l]     # (T,D_FF)
        act = _gelu_new(fc).astype(jnp.bfloat16)
        mlp_out = jnp.dot(act, wpr_ref[l],
                          preferred_element_type=jnp.float32) + sp[5:6]   # (T, D)
        x = x + mlp_out

    # ---- ln_f ----
    out_ref[...] = _layer_norm(x, lnf_ref[0:1], lnf_ref[1:2])


# ---------------------------------------------------------------------------
# Parameters (GPT-2 convention) + packing into the fused-kernel layout
# ---------------------------------------------------------------------------
def init_params(key):
    keys = jax.random.split(key, 2 + L_LAYER)
    scale = 0.02
    params = {
        "wte": scale * jax.random.normal(keys[0], (VOCAB, D_MODEL), jnp.float32),
        "wpe": scale * jax.random.normal(keys[1], (MAX_POS, D_MODEL), jnp.float32),
        "lnf_g": jnp.ones((1, D_MODEL), jnp.float32),
        "lnf_b": jnp.zeros((1, D_MODEL), jnp.float32),
        "blocks": [],
    }
    for l in range(L_LAYER):
        k = jax.random.split(keys[2 + l], 4)
        blk = {
            "ln1_g": jnp.ones((1, D_MODEL), jnp.float32),
            "ln1_b": jnp.zeros((1, D_MODEL), jnp.float32),
            "wqkv": scale * jax.random.normal(k[0], (D_MODEL, 3 * D_MODEL), jnp.float32),
            "bqkv": jnp.zeros((1, 3 * D_MODEL), jnp.float32),
            "wo": scale * jax.random.normal(k[1], (D_MODEL, D_MODEL), jnp.float32),
            "bo": jnp.zeros((1, D_MODEL), jnp.float32),
            "ln2_g": jnp.ones((1, D_MODEL), jnp.float32),
            "ln2_b": jnp.zeros((1, D_MODEL), jnp.float32),
            "wfc": scale * jax.random.normal(k[2], (D_MODEL, D_FF), jnp.float32),
            "bfc": jnp.zeros((1, D_FF), jnp.float32),
            "wpr": scale * jax.random.normal(k[3], (D_FF, D_MODEL), jnp.float32),
            "bpr": jnp.zeros((1, D_MODEL), jnp.float32),
        }
        params["blocks"].append(blk)
    return params


def pack_params(params):
    """GPT-2-convention params -> fused-kernel layout (bf16, stacked, q pre-scaled)."""
    D = D_MODEL
    inv_sqrt = 1.0 / math.sqrt(HEAD_DIM)
    # Fold 1/sqrt(head_dim) into the q columns (first D of the 3D output).
    qkv_scale = jnp.concatenate([jnp.full((D,), inv_sqrt, jnp.float32),
                                 jnp.ones((2 * D,), jnp.float32)])
    small, bqkv, bfc, wqkv, wo, wfc, wpr = ([] for _ in range(7))
    for blk in params["blocks"]:
        small.append(jnp.concatenate(
            [blk["ln1_g"], blk["ln1_b"], blk["ln2_g"], blk["ln2_b"],
             blk["bo"], blk["bpr"]], axis=0))                            # (6, D)
        wqkv.append(blk["wqkv"] * qkv_scale[None, :])                    # (D, 3D)
        bqkv.append(blk["bqkv"] * qkv_scale[None, :])                    # (1, 3D)
        wo.append(blk["wo"])                                             # (D, D)
        bfc.append(blk["bfc"])
        wfc.append(blk["wfc"])
        wpr.append(blk["wpr"])
    return {
        "wte": params["wte"],
        "wpe": params["wpe"],
        "small": jnp.stack(small),                                       # (L, 6, D)
        "bqkv": jnp.stack(bqkv),                                         # (L, 1, 3D)
        "bfc": jnp.stack(bfc),                                           # (L, 1, D_FF)
        "lnf": jnp.concatenate([params["lnf_g"], params["lnf_b"]], 0),   # (2, D)
        "wqkv": jnp.stack(wqkv).astype(jnp.bfloat16),                    # (L, D, 3D)
        "wo": jnp.stack(wo).astype(jnp.bfloat16),                        # (L, D, D)
        "wfc": jnp.stack(wfc).astype(jnp.bfloat16),                      # (L, D, D_FF)
        "wpr": jnp.stack(wpr).astype(jnp.bfloat16),                      # (L, D_FF, D)
    }


# ---------------------------------------------------------------------------
# JAX glue: mask construction, embedding gather, single fused call
# ---------------------------------------------------------------------------
def _round_up(n, m):
    return ((n + m - 1) // m) * m


def build_additive_mask(token_types, seq_len):
    # GenPromptEmb._generate_mask (-100 at language<->time_series pairs) fused
    # with the GPT-2 causal mask into one additive (S, S) mask.
    idx = jnp.arange(seq_len)
    causal = idx[:, None] >= idx[None, :]
    diff = token_types[:, None] != token_types[None, :]
    calibrated = jnp.where(diff, MASK_PENALTY, 0.0)
    return jnp.where(causal, calibrated, NEG_MASK).astype(jnp.float32)


def msk_forward_fused(packed, hidden, mask):
    """One fused kernel over the folded (T, D) hidden state (no grid)."""
    T, D = hidden.shape
    kern = functools.partial(msk_fused_kernel, n_head=N_HEAD,
                             head_dim=HEAD_DIM, n_layer=L_LAYER)
    return pl.pallas_call(
        kern,
        out_shape=jax.ShapeDtypeStruct((T, D), jnp.float32),
        scratch_shapes=[pltpu.VMEM((T, 3 * D), jnp.float32),   # fused qkv
                        pltpu.VMEM((T, D), jnp.float32)],       # flat ctx
    )(hidden, mask, packed["small"], packed["bqkv"], packed["bfc"],
      packed["lnf"], packed["wqkv"], packed["wo"], packed["wfc"], packed["wpr"])


def gen_prompt_emb_forward(packed, gt_token, hd_token, gt_types, hd_types):
    # GenPromptEmb.forward(GT_HD_token, HD_token, gt_token_types, hd_token_types)
    s_gt, s_hd = gt_token.shape[0], hd_token.shape[0]
    S_gt, S_hd = _round_up(s_gt, 8), _round_up(s_hd, 8)   # sublane-aligned segments
    T = S_gt + S_hd

    def pad_to(a, n):
        return jnp.pad(a, (0, n - a.shape[0]))

    # Both sequences folded into one block; positions restart per segment.
    tokens = jnp.concatenate([pad_to(gt_token, S_gt), pad_to(hd_token, S_hd)])
    positions = jnp.concatenate([jnp.arange(S_gt), jnp.arange(S_hd)])
    hidden = (packed["wte"][tokens] + packed["wpe"][positions]
              ).astype(jnp.float32)                                       # (T, D)

    # Block-diagonal additive mask: each segment keeps its own causal +
    # calibrated pattern; cross-segment attention is fully masked.  Padding is
    # appended at the END of each segment, so the causal mask guarantees real
    # rows never attend to padded keys; padded rows are sliced off below.
    mask = jnp.full((T, T), NEG_MASK, jnp.float32)
    mask = mask.at[:S_gt, :S_gt].set(build_additive_mask(pad_to(gt_types, S_gt), S_gt))
    mask = mask.at[S_gt:, S_gt:].set(build_additive_mask(pad_to(hd_types, S_hd), S_hd))

    out = msk_forward_fused(packed, hidden, mask)                         # (T, D)
    return out[:s_gt], out[S_gt:S_gt + s_hd]


if __name__ == "__main__":
    key = jax.random.PRNGKey(0)
    pkey, k1, k2, k3, k4 = jax.random.split(key, 5)
    params = init_params(pkey)
    packed = pack_params(params)

    S_GT, S_HD = 8, 8
    gt_token = jax.random.randint(k1, (S_GT,), 0, VOCAB, dtype=jnp.int32)
    hd_token = jax.random.randint(k2, (S_HD,), 0, VOCAB, dtype=jnp.int32)
    gt_types = jax.random.randint(k3, (S_GT,), 0, 2, dtype=jnp.int32)
    hd_types = jax.random.randint(k4, (S_HD,), 0, 2, dtype=jnp.int32)

    gt_emb, hd_emb = gen_prompt_emb_forward(packed, gt_token, hd_token,
                                            gt_types, hd_types)
    jax.block_until_ready((gt_emb, hd_emb))
    assert gt_emb.shape == (S_GT, D_MODEL) and gt_emb.dtype == jnp.float32
    assert hd_emb.shape == (S_HD, D_MODEL) and hd_emb.dtype == jnp.float32
    assert bool(jnp.all(jnp.isfinite(gt_emb))) and bool(jnp.all(jnp.isfinite(hd_emb)))
    print("KERNEL_OK")
</pallas_src>

<mosaic_0001>
module attributes {stable_mosaic.version = 11 : i64} {
  func.func @msk_fused_kernel(%arg0: memref<16x32xf32, #tpu.memory_space<vmem>>, %arg1: memref<16x16xf32, #tpu.memory_space<vmem>>, %arg2: memref<2x6x32xf32, #tpu.memory_space<vmem>>, %arg3: memref<2x1x96xf32, #tpu.memory_space<vmem>>, %arg4: memref<2x1x128xf32, #tpu.memory_space<vmem>>, %arg5: memref<2x32xf32, #tpu.memory_space<vmem>>, %arg6: memref<2x32x96xbf16, #tpu.memory_space<vmem>>, %arg7: memref<2x32x32xbf16, #tpu.memory_space<vmem>>, %arg8: memref<2x32x128xbf16, #tpu.memory_space<vmem>>, %arg9: memref<2x128x32xbf16, #tpu.memory_space<vmem>>, %arg10: memref<16x32xf32, #tpu.memory_space<vmem>>, %arg11: memref<16x96xf32, #tpu.memory_space<vmem>>, %arg12: memref<16x32xf32, #tpu.memory_space<vmem>>) attributes {dimension_semantics = [], scalar_prefetch = 0 : i64, scratch_operands = 2 : i64, tpu.core_type = #tpu.core_type<tc>} {
    %c0 = arith.constant 0 : index
    %c0_0 = arith.constant 0 : index
    %0 = vector.load %arg0[%c0, %c0_0] : memref<16x32xf32, #tpu.memory_space<vmem>>, vector<16x32xf32>
    %c0_1 = arith.constant 0 : index
    %c0_2 = arith.constant 0 : index
    %1 = vector.load %arg1[%c0_1, %c0_2] : memref<16x16xf32, #tpu.memory_space<vmem>>, vector<16x16xf32>
    %c0_3 = arith.constant 0 : index
    %c0_4 = arith.constant 0 : index
    %c0_5 = arith.constant 0 : index
    %2 = vector.load %arg2[%c0_3, %c0_4, %c0_5] : memref<2x6x32xf32, #tpu.memory_space<vmem>>, vector<1x6x32xf32>
    %3 = vector.shape_cast %2 : vector<1x6x32xf32> to vector<6x32xf32>
    %4 = vector.extract_strided_slice %3 {offsets = [0, 0], sizes = [1, 32], strides = [1, 1]} : vector<6x32xf32> to vector<1x32xf32>
    %5 = vector.extract_strided_slice %3 {offsets = [1, 0], sizes = [1, 32], strides = [1, 1]} : vector<6x32xf32> to vector<1x32xf32>
    %cst = arith.constant dense<0.000000e+00> : vector<16xf32>
    %6 = vector.multi_reduction <add>, %0, %cst [1] : vector<16x32xf32> to vector<16xf32>
    %7 = vector.shape_cast %6 : vector<16xf32> to vector<16x1xf32>
    %cst_6 = arith.constant 3.200000e+01 : f32
    %8 = vector.broadcast %cst_6 : f32 to vector<16x1xf32>
    %9 = arith.divf %7, %8 : vector<16x1xf32>
    %10 = vector.broadcast %9 : vector<16x1xf32> to vector<16x32xf32>
    %11 = arith.subf %0, %10 : vector<16x32xf32>
    %12 = arith.mulf %11, %11 : vector<16x32xf32>
    %cst_7 = arith.constant dense<0.000000e+00> : vector<16xf32>
    %13 = vector.multi_reduction <add>, %12, %cst_7 [1] : vector<16x32xf32> to vector<16xf32>
    %14 = vector.shape_cast %13 : vector<16xf32> to vector<16x1xf32>
    %cst_8 = arith.constant 3.200000e+01 : f32
    %15 = vector.broadcast %cst_8 : f32 to vector<16x1xf32>
    %16 = arith.divf %14, %15 : vector<16x1xf32>
    %17 = vector.broadcast %9 : vector<16x1xf32> to vector<16x32xf32>
    %18 = arith.subf %0, %17 : vector<16x32xf32>
    %cst_9 = arith.constant 9.99999974E-6 : f32
    %19 = vector.broadcast %cst_9 : f32 to vector<16x1xf32>
    %20 = arith.addf %16, %19 : vector<16x1xf32>
    %21 = math.rsqrt %20 : vector<16x1xf32>
    %22 = vector.broadcast %21 : vector<16x1xf32> to vector<16x32xf32>
    %23 = arith.mulf %18, %22 : vector<16x32xf32>
    %24 = vector.broadcast %4 : vector<1x32xf32> to vector<16x32xf32>
    %25 = arith.mulf %23, %24 : vector<16x32xf32>
    %26 = vector.broadcast %5 : vector<1x32xf32> to vector<16x32xf32>
    %27 = arith.addf %25, %26 : vector<16x32xf32>
    %28 = arith.truncf %27 : vector<16x32xf32> to vector<16x32xbf16>
    %c0_10 = arith.constant 0 : index
    %c0_11 = arith.constant 0 : index
    %c0_12 = arith.constant 0 : index
    %29 = vector.load %arg6[%c0_10, %c0_11, %c0_12] : memref<2x32x96xbf16, #tpu.memory_space<vmem>>, vector<1x32x96xbf16>
    %30 = vector.shape_cast %29 : vector<1x32x96xbf16> to vector<32x96xbf16>
    %cst_13 = arith.constant dense<0.000000e+00> : vector<16x96xf32>
    %31 = tpu.matmul %28, %30, %cst_13 {dimension_numbers = #tpu.dot_dimension_numbers<[1], [0], [0], [1], [0, 0, 1, 1], [], []>} : vector<16x32xbf16>, vector<32x96xbf16>, vector<16x96xf32> -> vector<16x96xf32>
    %c0_14 = arith.constant 0 : index
    %c0_15 = arith.constant 0 : index
    %c0_16 = arith.constant 0 : index
    %32 = vector.load %arg3[%c0_14, %c0_15, %c0_16] : memref<2x1x96xf32, #tpu.memory_space<vmem>>, vector<1x1x96xf32>
    %33 = vector.shape_cast %32 : vector<1x1x96xf32> to vector<1x96xf32>
    %34 = vector.broadcast %33 : vector<1x96xf32> to vector<16x96xf32>
    %35 = arith.addf %31, %34 : vector<16x96xf32>
    %c0_17 = arith.constant 0 : index
    %c0_18 = arith.constant 0 : index
    %36 = vector.load %arg11[%c0_17, %c0_18] : memref<16x96xf32, #tpu.memory_space<vmem>>, vector<16x96xf32>
    tpu.vector_store %arg11[%c0_17, %c0_18], %35 {strides = array<i32>} : memref<16x96xf32, #tpu.memory_space<vmem>>, vector<16x96xf32>,
    %c0_19 = arith.constant 0 : index
    %c0_20 = arith.constant 0 : index
    %37 = vector.load %arg11[%c0_19, %c0_20] : memref<16x96xf32, #tpu.memory_space<vmem>>, vector<16x8xf32>
    %38 = arith.truncf %37 : vector<16x8xf32> to vector<16x8xbf16>
    %c0_21 = arith.constant 0 : index
    %c32 = arith.constant 32 : index
    %39 = vector.load %arg11[%c0_21, %c32] : memref<16x96xf32, #tpu.memory_space<vmem>>, vector<16x8xf32>
    %40 = arith.truncf %39 : vector<16x8xf32> to vector<16x8xbf16>
    %c0_22 = arith.constant 0 : index
    %c64 = arith.constant 64 : index
    %41 = vector.load %arg11[%c0_22, %c64] : memref<16x96xf32, #tpu.memory_space<vmem>>, vector<16x8xf32>
    %42 = arith.truncf %41 : vector<16x8xf32> to vector<16x8xbf16>
    "tpu.trace_start"() <{level = 10 : i32, message = "qd,kd->qk"}> : () -> ()
    %cst_23 = arith.constant dense<0.000000e+00> : vector<16x16xf32>
    %43 = tpu.matmul %38, %40, %cst_23 {dimension_numbers = #tpu.dot_dimension_numbers<[1], [1], [0], [0], [0, 0, 1, 0], [], []>} : vector<16x8xbf16>, vector<16x8xbf16>, vector<16x16xf32> -> vector<16x16xf32>
    "tpu.trace_stop"() : () -> ()
    %44 = arith.addf %43, %1 : vector<16x16xf32>
    %cst_24 = arith.constant dense<0xFF800000> : vector<16xf32>
    %45 = vector.multi_reduction <maximumf>, %44, %cst_24 [1] : vector<16x16xf32> to vector<16xf32>
    %46 = vector.shape_cast %45 : vector<16xf32> to vector<16x1xf32>
    %47 = vector.broadcast %46 : vector<16x1xf32> to vector<16x16xf32>
    %48 = arith.subf %44, %47 : vector<16x16xf32>
    %49 = math.exp %48 : vector<16x16xf32>
    %cst_25 = arith.constant dense<0.000000e+00> : vector<16xf32>
    %50 = vector.multi_reduction <add>, %49, %cst_25 [1] : vector<16x16xf32> to vector<16xf32>
    %51 = vector.shape_cast %50 : vector<16xf32> to vector<16x1xf32>
    %52 = tpu.reciprocal %51 {approx = true} : vector<16x1xf32> -> vector<16x1xf32>
    %53 = vector.broadcast %52 : vector<16x1xf32> to vector<16x16xf32>
    %54 = arith.mulf %49, %53 : vector<16x16xf32>
    %55 = arith.truncf %54 : vector<16x16xf32> to vector<16x16xbf16>
    %cst_26 = arith.constant dense<0.000000e+00> : vector<16x8xf32>
    %56 = tpu.matmul %55, %42, %cst_26 {dimension_numbers = #tpu.dot_dimension_numbers<[1], [0], [0], [1], [0, 0, 1, 1], [], []>} : vector<16x16xbf16>, vector<16x8xbf16>, vector<16x8xf32> -> vector<16x8xf32>
    %c0_27 = arith.constant 0 : index
    %c0_28 = arith.constant 0 : index
    %57 = vector.load %arg12[%c0_27, %c0_28] : memref<16x32xf32, #tpu.memory_space<vmem>>, vector<16x8xf32>
    tpu.vector_store %arg12[%c0_27, %c0_28], %56 {strides = array<i32>} : memref<16x32xf32, #tpu.memory_space<vmem>>, vector<16x8xf32>,
    %c0_29 = arith.constant 0 : index
    %c8 = arith.constant 8 : index
    %58 = vector.load %arg11[%c0_29, %c8] : memref<16x96xf32, #tpu.memory_space<vmem>>, vector<16x8xf32>
    %59 = arith.truncf %58 : vector<16x8xf32> to vector<16x8xbf16>
    %c0_30 = arith.constant 0 : index
    %c40 = arith.constant 40 : index
    %60 = vector.load %arg11[%c0_30, %c40] : memref<16x96xf32, #tpu.memory_space<vmem>>, vector<16x8xf32>
    %61 = arith.truncf %60 : vector<16x8xf32> to vector<16x8xbf16>
    %c0_31 = arith.constant 0 : index
    %c72 = arith.constant 72 : index
    %62 = vector.load %arg11[%c0_31, %c72] : memref<16x96xf32, #tpu.memory_space<vmem>>, vector<16x8xf32>
    %63 = arith.truncf %62 : vector<16x8xf32> to vector<16x8xbf16>
    "tpu.trace_start"() <{level = 10 : i32, message = "qd,kd->qk"}> : () -> ()
    %cst_32 = arith.constant dense<0.000000e+00> : vector<16x16xf32>
    %64 = tpu.matmul %59, %61, %cst_32 {dimension_numbers = #tpu.dot_dimension_numbers<[1], [1], [0], [0], [0, 0, 1, 0], [], []>} : vector<16x8xbf16>, vector<16x8xbf16>, vector<16x16xf32> -> vector<16x16xf32>
    "tpu.trace_stop"() : () -> ()
    %65 = arith.addf %64, %1 : vector<16x16xf32>
    %cst_33 = arith.constant dense<0xFF800000> : vector<16xf32>
    %66 = vector.multi_reduction <maximumf>, %65, %cst_33 [1] : vector<16x16xf32> to vector<16xf32>
    %67 = vector.shape_cast %66 : vector<16xf32> to vector<16x1xf32>
    %68 = vector.broadcast %67 : vector<16x1xf32> to vector<16x16xf32>
    %69 = arith.subf %65, %68 : vector<16x16xf32>
    %70 = math.exp %69 : vector<16x16xf32>
    %cst_34 = arith.constant dense<0.000000e+00> : vector<16xf32>
    %71 = vector.multi_reduction <add>, %70, %cst_34 [1] : vector<16x16xf32> to vector<16xf32>
    %72 = vector.shape_cast %71 : vector<16xf32> to vector<16x1xf32>
    %73 = tpu.reciprocal %72 {approx = true} : vector<16x1xf32> -> vector<16x1xf32>
    %74 = vector.broadcast %73 : vector<16x1xf32> to vector<16x16xf32>
    %75 = arith.mulf %70, %74 : vector<16x16xf32>
    %76 = arith.truncf %75 : vector<16x16xf32> to vector<16x16xbf16>
    %cst_35 = arith.constant dense<0.000000e+00> : vector<16x8xf32>
    %77 = tpu.matmul %76, %63, %cst_35 {dimension_numbers = #tpu.dot_dimension_numbers<[1], [0], [0], [1], [0, 0, 1, 1], [], []>} : vector<16x16xbf16>, vector<16x8xbf16>, vector<16x8xf32> -> vector<16x8xf32>
    %c0_36 = arith.constant 0 : index
    %c8_37 = arith.constant 8 : index
    %78 = vector.load %arg12[%c0_36, %c8_37] : memref<16x32xf32, #tpu.memory_space<vmem>>, vector<16x8xf32>
    tpu.vector_store %arg12[%c0_36, %c8_37], %77 {strides = array<i32>} : memref<16x32xf32, #tpu.memory_space<vmem>>, vector<16x8xf32>,
    %c0_38 = arith.constant 0 : index
    %c16 = arith.constant 16 : index
    %79 = vector.load %arg11[%c0_38, %c16] : memref<16x96xf32, #tpu.memory_space<vmem>>, vector<16x8xf32>
    %80 = arith.truncf %79 : vector<16x8xf32> to vector<16x8xbf16>
    %c0_39 = arith.constant 0 : index
    %c48 = arith.constant 48 : index
    %81 = vector.load %arg11[%c0_39, %c48] : memref<16x96xf32, #tpu.memory_space<vmem>>, vector<16x8xf32>
    %82 = arith.truncf %81 : vector<16x8xf32> to vector<16x8xbf16>
    %c0_40 = arith.constant 0 : index
    %c80 = arith.constant 80 : index
    %83 = vector.load %arg11[%c0_40, %c80] : memref<16x96xf32, #tpu.memory_space<vmem>>, vector<16x8xf32>
    %84 = arith.truncf %83 : vector<16x8xf32> to vector<16x8xbf16>
    "tpu.trace_start"() <{level = 10 : i32, message = "qd,kd->qk"}> : () -> ()
    %cst_41 = arith.constant dense<0.000000e+00> : vector<16x16xf32>
    %85 = tpu.matmul %80, %82, %cst_41 {dimension_numbers = #tpu.dot_dimension_numbers<[1], [1], [0], [0], [0, 0, 1, 0], [], []>} : vector<16x8xbf16>, vector<16x8xbf16>, vector<16x16xf32> -> vector<16x16xf32>
    "tpu.trace_stop"() : () -> ()
    %86 = arith.addf %85, %1 : vector<16x16xf32>
    %cst_42 = arith.constant dense<0xFF800000> : vector<16xf32>
    %87 = vector.multi_reduction <maximumf>, %86, %cst_42 [1] : vector<16x16xf32> to vector<16xf32>
    %88 = vector.shape_cast %87 : vector<16xf32> to vector<16x1xf32>
    %89 = vector.broadcast %88 : vector<16x1xf32> to vector<16x16xf32>
    %90 = arith.subf %86, %89 : vector<16x16xf32>
    %91 = math.exp %90 : vector<16x16xf32>
    %cst_43 = arith.constant dense<0.000000e+00> : vector<16xf32>
    %92 = vector.multi_reduction <add>, %91, %cst_43 [1] : vector<16x16xf32> to vector<16xf32>
    %93 = vector.shape_cast %92 : vector<16xf32> to vector<16x1xf32>
    %94 = tpu.reciprocal %93 {approx = true} : vector<16x1xf32> -> vector<16x1xf32>
    %95 = vector.broadcast %94 : vector<16x1xf32> to vector<16x16xf32>
    %96 = arith.mulf %91, %95 : vector<16x16xf32>
    %97 = arith.truncf %96 : vector<16x16xf32> to vector<16x16xbf16>
    %cst_44 = arith.constant dense<0.000000e+00> : vector<16x8xf32>
    %98 = tpu.matmul %97, %84, %cst_44 {dimension_numbers = #tpu.dot_dimension_numbers<[1], [0], [0], [1], [0, 0, 1, 1], [], []>} : vector<16x16xbf16>, vector<16x8xbf16>, vector<16x8xf32> -> vector<16x8xf32>
    %c0_45 = arith.constant 0 : index
    %c16_46 = arith.constant 16 : index
    %99 = vector.load %arg12[%c0_45, %c16_46] : memref<16x32xf32, #tpu.memory_space<vmem>>, vector<16x8xf32>
    tpu.vector_store %arg12[%c0_45, %c16_46], %98 {strides = array<i32>} : memref<16x32xf32, #tpu.memory_space<vmem>>, vector<16x8xf32>,
    %c0_47 = arith.constant 0 : index
    %c24 = arith.constant 24 : index
    %100 = vector.load %arg11[%c0_47, %c24] : memref<16x96xf32, #tpu.memory_space<vmem>>, vector<16x8xf32>
    %101 = arith.truncf %100 : vector<16x8xf32> to vector<16x8xbf16>
    %c0_48 = arith.constant 0 : index
    %c56 = arith.constant 56 : index
    %102 = vector.load %arg11[%c0_48, %c56] : memref<16x96xf32, #tpu.memory_space<vmem>>, vector<16x8xf32>
    %103 = arith.truncf %102 : vector<16x8xf32> to vector<16x8xbf16>
    %c0_49 = arith.constant 0 : index
    %c88 = arith.constant 88 : index
    %104 = vector.load %arg11[%c0_49, %c88] : memref<16x96xf32, #tpu.memory_space<vmem>>, vector<16x8xf32>
    %105 = arith.truncf %104 : vector<16x8xf32> to vector<16x8xbf16>
    "tpu.trace_start"() <{level = 10 : i32, message = "qd,kd->qk"}> : () -> ()
    %cst_50 = arith.constant dense<0.000000e+00> : vector<16x16xf32>
    %106 = tpu.matmul %101, %103, %cst_50 {dimension_numbers = #tpu.dot_dimension_numbers<[1], [1], [0], [0], [0, 0, 1, 0], [], []>} : vector<16x8xbf16>, vector<16x8xbf16>, vector<16x16xf32> -> vector<16x16xf32>
    "tpu.trace_stop"() : () -> ()
    %107 = arith.addf %106, %1 : vector<16x16xf32>
    %cst_51 = arith.constant dense<0xFF800000> : vector<16xf32>
    %108 = vector.multi_reduction <maximumf>, %107, %cst_51 [1] : vector<16x16xf32> to vector<16xf32>
    %109 = vector.shape_cast %108 : vector<16xf32> to vector<16x1xf32>
    %110 = vector.broadcast %109 : vector<16x1xf32> to vector<16x16xf32>
    %111 = arith.subf %107, %110 : vector<16x16xf32>
    %112 = math.exp %111 : vector<16x16xf32>
    %cst_52 = arith.constant dense<0.000000e+00> : vector<16xf32>
    %113 = vector.multi_reduction <add>, %112, %cst_52 [1] : vector<16x16xf32> to vector<16xf32>
    %114 = vector.shape_cast %113 : vector<16xf32> to vector<16x1xf32>
    %115 = tpu.reciprocal %114 {approx = true} : vector<16x1xf32> -> vector<16x1xf32>
    %116 = vector.broadcast %115 : vector<16x1xf32> to vector<16x16xf32>
    %117 = arith.mulf %112, %116 : vector<16x16xf32>
    %118 = arith.truncf %117 : vector<16x16xf32> to vector<16x16xbf16>
    %cst_53 = arith.constant dense<0.000000e+00> : vector<16x8xf32>
    %119 = tpu.matmul %118, %105, %cst_53 {dimension_numbers = #tpu.dot_dimension_numbers<[1], [0], [0], [1], [0, 0, 1, 1], [], []>} : vector<16x16xbf16>, vector<16x8xbf16>, vector<16x8xf32> -> vector<16x8xf32>
    %c0_54 = arith.constant 0 : index
    %c24_55 = arith.constant 24 : index
    %120 = vector.load %arg12[%c0_54, %c24_55] : memref<16x32xf32, #tpu.memory_space<vmem>>, vector<16x8xf32>
    tpu.vector_store %arg12[%c0_54, %c24_55], %119 {strides = array<i32>} : memref<16x32xf32, #tpu.memory_space<vmem>>, vector<16x8xf32>,
    %c0_56 = arith.constant 0 : index
    %c0_57 = arith.constant 0 : index
    %121 = vector.load %arg12[%c0_56, %c0_57] : memref<16x32xf32, #tpu.memory_space<vmem>>, vector<16x32xf32>
    %122 = arith.truncf %121 : vector<16x32xf32> to vector<16x32xbf16>
    %c0_58 = arith.constant 0 : index
    %c0_59 = arith.constant 0 : index
    %c0_60 = arith.constant 0 : index
    %123 = vector.load %arg7[%c0_58, %c0_59, %c0_60] : memref<2x32x32xbf16, #tpu.memory_space<vmem>>, vector<1x32x32xbf16>
    %124 = vector.shape_cast %123 : vector<1x32x32xbf16> to vector<32x32xbf16>
    %cst_61 = arith.constant dense<0.000000e+00> : vector<16x32xf32>
    %125 = tpu.matmul %122, %124, %cst_61 {dimension_numbers = #tpu.dot_dimension_numbers<[1], [0], [0], [1], [0, 0, 1, 1], [], []>} : vector<16x32xbf16>, vector<32x32xbf16>, vector<16x32xf32> -> vector<16x32xf32>
    %126 = vector.extract_strided_slice %3 {offsets = [4, 0], sizes = [1, 32], strides = [1, 1]} : vector<6x32xf32> to vector<1x32xf32>
    %127 = vector.broadcast %126 : vector<1x32xf32> to vector<16x32xf32>
    %128 = arith.addf %125, %127 : vector<16x32xf32>
    %129 = arith.addf %0, %128 : vector<16x32xf32>
    %130 = vector.extract_strided_slice %3 {offsets = [2, 0], sizes = [1, 32], strides = [1, 1]} : vector<6x32xf32> to vector<1x32xf32>
    %131 = vector.extract_strided_slice %3 {offsets = [3, 0], sizes = [1, 32], strides = [1, 1]} : vector<6x32xf32> to vector<1x32xf32>
    %cst_62 = arith.constant dense<0.000000e+00> : vector<16xf32>
    %132 = vector.multi_reduction <add>, %129, %cst_62 [1] : vector<16x32xf32> to vector<16xf32>
    %133 = vector.shape_cast %132 : vector<16xf32> to vector<16x1xf32>
    %cst_63 = arith.constant 3.200000e+01 : f32
    %134 = vector.broadcast %cst_63 : f32 to vector<16x1xf32>
    %135 = arith.divf %133, %134 : vector<16x1xf32>
    %136 = vector.broadcast %135 : vector<16x1xf32> to vector<16x32xf32>
    %137 = arith.subf %129, %136 : vector<16x32xf32>
    %138 = arith.mulf %137, %137 : vector<16x32xf32>
    %cst_64 = arith.constant dense<0.000000e+00> : vector<16xf32>
    %139 = vector.multi_reduction <add>, %138, %cst_64 [1] : vector<16x32xf32> to vector<16xf32>
    %140 = vector.shape_cast %139 : vector<16xf32> to vector<16x1xf32>
    %cst_65 = arith.constant 3.200000e+01 : f32
    %141 = vector.broadcast %cst_65 : f32 to vector<16x1xf32>
    %142 = arith.divf %140, %141 : vector<16x1xf32>
    %143 = vector.broadcast %135 : vector<16x1xf32> to vector<16x32xf32>
    %144 = arith.subf %129, %143 : vector<16x32xf32>
    %cst_66 = arith.constant 9.99999974E-6 : f32
    %145 = vector.broadcast %cst_66 : f32 to vector<16x1xf32>
    %146 = arith.addf %142, %145 : vector<16x1xf32>
    %147 = math.rsqrt %146 : vector<16x1xf32>
    %148 = vector.broadcast %147 : vector<16x1xf32> to vector<16x32xf32>
    %149 = arith.mulf %144, %148 : vector<16x32xf32>
    %150 = vector.broadcast %130 : vector<1x32xf32> to vector<16x32xf32>
    %151 = arith.mulf %149, %150 : vector<16x32xf32>
    %152 = vector.broadcast %131 : vector<1x32xf32> to vector<16x32xf32>
    %153 = arith.addf %151, %152 : vector<16x32xf32>
    %154 = arith.truncf %153 : vector<16x32xf32> to vector<16x32xbf16>
    %c0_67 = arith.constant 0 : index
    %c0_68 = arith.constant 0 : index
    %c0_69 = arith.constant 0 : index
    %155 = vector.load %arg8[%c0_67, %c0_68, %c0_69] : memref<2x32x128xbf16, #tpu.memory_space<vmem>>, vector<1x32x128xbf16>
    %156 = vector.shape_cast %155 : vector<1x32x128xbf16> to vector<32x128xbf16>
    %cst_70 = arith.constant dense<0.000000e+00> : vector<16x128xf32>
    %157 = tpu.matmul %154, %156, %cst_70 {dimension_numbers = #tpu.dot_dimension_numbers<[1], [0], [0], [1], [0, 0, 1, 1], [], []>} : vector<16x32xbf16>, vector<32x128xbf16>, vector<16x128xf32> -> vector<16x128xf32>
    %c0_71 = arith.constant 0 : index
    %c0_72 = arith.constant 0 : index
    %c0_73 = arith.constant 0 : index
    %158 = vector.load %arg4[%c0_71, %c0_72, %c0_73] : memref<2x1x128xf32, #tpu.memory_space<vmem>>, vector<1x1x128xf32>
    %159 = vector.shape_cast %158 : vector<1x1x128xf32> to vector<1x128xf32>
    %160 = vector.broadcast %159 : vector<1x128xf32> to vector<16x128xf32>
    %161 = arith.addf %157, %160 : vector<16x128xf32>
    %cst_74 = arith.constant 5.000000e-01 : f32
    %162 = vector.broadcast %cst_74 : f32 to vector<16x128xf32>
    %163 = arith.mulf %162, %161 : vector<16x128xf32>
    %cst_75 = arith.constant 4.471500e-02 : f32
    %164 = vector.broadcast %cst_75 : f32 to vector<16x128xf32>
    %165 = arith.mulf %164, %161 : vector<16x128xf32>
    %166 = arith.mulf %165, %161 : vector<16x128xf32>
    %167 = arith.mulf %166, %161 : vector<16x128xf32>
    %168 = arith.addf %161, %167 : vector<16x128xf32>
    %cst_76 = arith.constant 0.797884583 : f32
    %169 = vector.broadcast %cst_76 : f32 to vector<16x128xf32>
    %170 = arith.mulf %169, %168 : vector<16x128xf32>
    %171 = math.tanh %170 : vector<16x128xf32>
    %cst_77 = arith.constant 1.000000e+00 : f32
    %172 = vector.broadcast %cst_77 : f32 to vector<16x128xf32>
    %173 = arith.addf %172, %171 : vector<16x128xf32>
    %174 = arith.mulf %163, %173 : vector<16x128xf32>
    %175 = arith.truncf %174 : vector<16x128xf32> to vector<16x128xbf16>
    %c0_78 = arith.constant 0 : index
    %c0_79 = arith.constant 0 : index
    %c0_80 = arith.constant 0 : index
    %176 = vector.load %arg9[%c0_78, %c0_79, %c0_80] : memref<2x128x32xbf16, #tpu.memory_space<vmem>>, vector<1x128x32xbf16>
    %177 = vector.shape_cast %176 : vector<1x128x32xbf16> to vector<128x32xbf16>
    %cst_81 = arith.constant dense<0.000000e+00> : vector<16x32xf32>
    %178 = tpu.matmul %175, %177, %cst_81 {dimension_numbers = #tpu.dot_dimension_numbers<[1], [0], [0], [1], [0, 0, 1, 1], [], []>} : vector<16x128xbf16>, vector<128x32xbf16>, vector<16x32xf32> -> vector<16x32xf32>
    %179 = vector.extract_strided_slice %3 {offsets = [5, 0], sizes = [1, 32], strides = [1, 1]} : vector<6x32xf32> to vector<1x32xf32>
    %180 = vector.broadcast %179 : vector<1x32xf32> to vector<16x32xf32>
    %181 = arith.addf %178, %180 : vector<16x32xf32>
    %182 = arith.addf %129, %181 : vector<16x32xf32>
    %c1 = arith.constant 1 : index
    %c0_82 = arith.constant 0 : index
    %c0_83 = arith.constant 0 : index
    %183 = vector.load %arg2[%c1, %c0_82, %c0_83] : memref<2x6x32xf32, #tpu.memory_space<vmem>>, vector<1x6x32xf32>
    %184 = vector.shape_cast %183 : vector<1x6x32xf32> to vector<6x32xf32>
    %185 = vector.extract_strided_slice %184 {offsets = [0, 0], sizes = [1, 32], strides = [1, 1]} : vector<6x32xf32> to vector<1x32xf32>
    %186 = vector.extract_strided_slice %184 {offsets = [1, 0], sizes = [1, 32], strides = [1, 1]} : vector<6x32xf32> to vector<1x32xf32>
    %cst_84 = arith.constant dense<0.000000e+00> : vector<16xf32>
    %187 = vector.multi_reduction <add>, %182, %cst_84 [1] : vector<16x32xf32> to vector<16xf32>
    %188 = vector.shape_cast %187 : vector<16xf32> to vector<16x1xf32>
    %cst_85 = arith.constant 3.200000e+01 : f32
    %189 = vector.broadcast %cst_85 : f32 to vector<16x1xf32>
    %190 = arith.divf %188, %189 : vector<16x1xf32>
    %191 = vector.broadcast %190 : vector<16x1xf32> to vector<16x32xf32>
    %192 = arith.subf %182, %191 : vector<16x32xf32>
    %193 = arith.mulf %192, %192 : vector<16x32xf32>
    %cst_86 = arith.constant dense<0.000000e+00> : vector<16xf32>
    %194 = vector.multi_reduction <add>, %193, %cst_86 [1] : vector<16x32xf32> to vector<16xf32>
    %195 = vector.shape_cast %194 : vector<16xf32> to vector<16x1xf32>
    %cst_87 = arith.constant 3.200000e+01 : f32
    %196 = vector.broadcast %cst_87 : f32 to vector<16x1xf32>
    %197 = arith.divf %195, %196 : vector<16x1xf32>
    %198 = vector.broadcast %190 : vector<16x1xf32> to vector<16x32xf32>
    %199 = arith.subf %182, %198 : vector<16x32xf32>
    %cst_88 = arith.constant 9.99999974E-6 : f32
    %200 = vector.broadcast %cst_88 : f32 to vector<16x1xf32>
    %201 = arith.addf %197, %200 : vector<16x1xf32>
    %202 = math.rsqrt %201 : vector<16x1xf32>
    %203 = vector.broadcast %202 : vector<16x1xf32> to vector<16x32xf32>
    %204 = arith.mulf %199, %203 : vector<16x32xf32>
    %205 = vector.broadcast %185 : vector<1x32xf32> to vector<16x32xf32>
    %206 = arith.mulf %204, %205 : vector<16x32xf32>
    %207 = vector.broadcast %186 : vector<1x32xf32> to vector<16x32xf32>
    %208 = arith.addf %206, %207 : vector<16x32xf32>
    %209 = arith.truncf %208 : vector<16x32xf32> to vector<16x32xbf16>
    %c1_89 = arith.constant 1 : index
    %c0_90 = arith.constant 0 : index
    %c0_91 = arith.constant 0 : index
    %210 = vector.load %arg6[%c1_89, %c0_90, %c0_91] : memref<2x32x96xbf16, #tpu.memory_space<vmem>>, vector<1x32x96xbf16>
    %211 = vector.shape_cast %210 : vector<1x32x96xbf16> to vector<32x96xbf16>
    %cst_92 = arith.constant dense<0.000000e+00> : vector<16x96xf32>
    %212 = tpu.matmul %209, %211, %cst_92 {dimension_numbers = #tpu.dot_dimension_numbers<[1], [0], [0], [1], [0, 0, 1, 1], [], []>} : vector<16x32xbf16>, vector<32x96xbf16>, vector<16x96xf32> -> vector<16x96xf32>
    %c1_93 = arith.constant 1 : index
    %c0_94 = arith.constant 0 : index
    %c0_95 = arith.constant 0 : index
    %213 = vector.load %arg3[%c1_93, %c0_94, %c0_95] : memref<2x1x96xf32, #tpu.memory_space<vmem>>, vector<1x1x96xf32>
    %214 = vector.shape_cast %213 : vector<1x1x96xf32> to vector<1x96xf32>
    %215 = vector.broadcast %214 : vector<1x96xf32> to vector<16x96xf32>
    %216 = arith.addf %212, %215 : vector<16x96xf32>
    %c0_96 = arith.constant 0 : index
    %c0_97 = arith.constant 0 : index
    %217 = vector.load %arg11[%c0_96, %c0_97] : memref<16x96xf32, #tpu.memory_space<vmem>>, vector<16x96xf32>
    tpu.vector_store %arg11[%c0_96, %c0_97], %216 {strides = array<i32>} : memref<16x96xf32, #tpu.memory_space<vmem>>, vector<16x96xf32>,
    %c0_98 = arith.constant 0 : index
    %c0_99 = arith.constant 0 : index
    %218 = vector.load %arg11[%c0_98, %c0_99] : memref<16x96xf32, #tpu.memory_space<vmem>>, vector<16x8xf32>
    %219 = arith.truncf %218 : vector<16x8xf32> to vector<16x8xbf16>
    %c0_100 = arith.constant 0 : index
    %c32_101 = arith.constant 32 : index
    %220 = vector.load %arg11[%c0_100, %c32_101] : memref<16x96xf32, #tpu.memory_space<vmem>>, vector<16x8xf32>
    %221 = arith.truncf %220 : vector<16x8xf32> to vector<16x8xbf16>
    %c0_102 = arith.constant 0 : index
    %c64_103 = arith.constant 64 : index
    %222 = vector.load %arg11[%c0_102, %c64_103] : memref<16x96xf32, #tpu.memory_space<vmem>>, vector<16x8xf32>
    %223 = arith.truncf %222 : vector<16x8xf32> to vector<16x8xbf16>
    "tpu.trace_start"() <{level = 10 : i32, message = "qd,kd->qk"}> : () -> ()
    %cst_104 = arith.constant dense<0.000000e+00> : vector<16x16xf32>
    %224 = tpu.matmul %219, %221, %cst_104 {dimension_numbers = #tpu.dot_dimension_numbers<[1], [1], [0], [0], [0, 0, 1, 0], [], []>} : vector<16x8xbf16>, vector<16x8xbf16>, vector<16x16xf32> -> vector<16x16xf32>
    "tpu.trace_stop"() : () -> ()
    %225 = arith.addf %224, %1 : vector<16x16xf32>
    %cst_105 = arith.constant dense<0xFF800000> : vector<16xf32>
    %226 = vector.multi_reduction <maximumf>, %225, %cst_105 [1] : vector<16x16xf32> to vector<16xf32>
    %227 = vector.shape_cast %226 : vector<16xf32> to vector<16x1xf32>
    %228 = vector.broadcast %227 : vector<16x1xf32> to vector<16x16xf32>
    %229 = arith.subf %225, %228 : vector<16x16xf32>
    %230 = math.exp %229 : vector<16x16xf32>
    %cst_106 = arith.constant dense<0.000000e+00> : vector<16xf32>
    %231 = vector.multi_reduction <add>, %230, %cst_106 [1] : vector<16x16xf32> to vector<16xf32>
    %232 = vector.shape_cast %231 : vector<16xf32> to vector<16x1xf32>
    %233 = tpu.reciprocal %232 {approx = true} : vector<16x1xf32> -> vector<16x1xf32>
    %234 = vector.broadcast %233 : vector<16x1xf32> to vector<16x16xf32>
    %235 = arith.mulf %230, %234 : vector<16x16xf32>
    %236 = arith.truncf %235 : vector<16x16xf32> to vector<16x16xbf16>
    %cst_107 = arith.constant dense<0.000000e+00> : vector<16x8xf32>
    %237 = tpu.matmul %236, %223, %cst_107 {dimension_numbers = #tpu.dot_dimension_numbers<[1], [0], [0], [1], [0, 0, 1, 1], [], []>} : vector<16x16xbf16>, vector<16x8xbf16>, vector<16x8xf32> -> vector<16x8xf32>
    %c0_108 = arith.constant 0 : index
    %c0_109 = arith.constant 0 : index
    %238 = vector.load %arg12[%c0_108, %c0_109] : memref<16x32xf32, #tpu.memory_space<vmem>>, vector<16x8xf32>
    tpu.vector_store %arg12[%c0_108, %c0_109], %237 {strides = array<i32>} : memref<16x32xf32, #tpu.memory_space<vmem>>, vector<16x8xf32>,
    %c0_110 = arith.constant 0 : index
    %c8_111 = arith.constant 8 : index
    %239 = vector.load %arg11[%c0_110, %c8_111] : memref<16x96xf32, #tpu.memory_space<vmem>>, vector<16x8xf32>
    %240 = arith.truncf %239 : vector<16x8xf32> to vector<16x8xbf16>
    %c0_112 = arith.constant 0 : index
    %c40_113 = arith.constant 40 : index
    %241 = vector.load %arg11[%c0_112, %c40_113] : memref<16x96xf32, #tpu.memory_space<vmem>>, vector<16x8xf32>
    %242 = arith.truncf %241 : vector<16x8xf32> to vector<16x8xbf16>
    %c0_114 = arith.constant 0 : index
    %c72_115 = arith.constant 72 : index
    %243 = vector.load %arg11[%c0_114, %c72_115] : memref<16x96xf32, #tpu.memory_space<vmem>>, vector<16x8xf32>
    %244 = arith.truncf %243 : vector<16x8xf32> to vector<16x8xbf16>
    "tpu.trace_start"() <{level = 10 : i32, message = "qd,kd->qk"}> : () -> ()
    %cst_116 = arith.constant dense<0.000000e+00> : vector<16x16xf32>
    %245 = tpu.matmul %240, %242, %cst_116 {dimension_numbers = #tpu.dot_dimension_numbers<[1], [1], [0], [0], [0, 0, 1, 0], [], []>} : vector<16x8xbf16>, vector<16x8xbf16>, vector<16x16xf32> -> vector<16x16xf32>
    "tpu.trace_stop"() : () -> ()
    %246 = arith.addf %245, %1 : vector<16x16xf32>
    %cst_117 = arith.constant dense<0xFF800000> : vector<16xf32>
    %247 = vector.multi_reduction <maximumf>, %246, %cst_117 [1] : vector<16x16xf32> to vector<16xf32>
    %248 = vector.shape_cast %247 : vector<16xf32> to vector<16x1xf32>
    %249 = vector.broadcast %248 : vector<16x1xf32> to vector<16x16xf32>
    %250 = arith.subf %246, %249 : vector<16x16xf32>
    %251 = math.exp %250 : vector<16x16xf32>
    %cst_118 = arith.constant dense<0.000000e+00> : vector<16xf32>
    %252 = vector.multi_reduction <add>, %251, %cst_118 [1] : vector<16x16xf32> to vector<16xf32>
    %253 = vector.shape_cast %252 : vector<16xf32> to vector<16x1xf32>
    %254 = tpu.reciprocal %253 {approx = true} : vector<16x1xf32> -> vector<16x1xf32>
    %255 = vector.broadcast %254 : vector<16x1xf32> to vector<16x16xf32>
    %256 = arith.mulf %251, %255 : vector<16x16xf32>
    %257 = arith.truncf %256 : vector<16x16xf32> to vector<16x16xbf16>
    %cst_119 = arith.constant dense<0.000000e+00> : vector<16x8xf32>
    %258 = tpu.matmul %257, %244, %cst_119 {dimension_numbers = #tpu.dot_dimension_numbers<[1], [0], [0], [1], [0, 0, 1, 1], [], []>} : vector<16x16xbf16>, vector<16x8xbf16>, vector<16x8xf32> -> vector<16x8xf32>
    %c0_120 = arith.constant 0 : index
    %c8_121 = arith.constant 8 : index
    %259 = vector.load %arg12[%c0_120, %c8_121] : memref<16x32xf32, #tpu.memory_space<vmem>>, vector<16x8xf32>
    tpu.vector_store %arg12[%c0_120, %c8_121], %258 {strides = array<i32>} : memref<16x32xf32, #tpu.memory_space<vmem>>, vector<16x8xf32>,
    %c0_122 = arith.constant 0 : index
    %c16_123 = arith.constant 16 : index
    %260 = vector.load %arg11[%c0_122, %c16_123] : memref<16x96xf32, #tpu.memory_space<vmem>>, vector<16x8xf32>
    %261 = arith.truncf %260 : vector<16x8xf32> to vector<16x8xbf16>
    %c0_124 = arith.constant 0 : index
    %c48_125 = arith.constant 48 : index
    %262 = vector.load %arg11[%c0_124, %c48_125] : memref<16x96xf32, #tpu.memory_space<vmem>>, vector<16x8xf32>
    %263 = arith.truncf %262 : vector<16x8xf32> to vector<16x8xbf16>
    %c0_126 = arith.constant 0 : index
    %c80_127 = arith.constant 80 : index
    %264 = vector.load %arg11[%c0_126, %c80_127] : memref<16x96xf32, #tpu.memory_space<vmem>>, vector<16x8xf32>
    %265 = arith.truncf %264 : vector<16x8xf32> to vector<16x8xbf16>
    "tpu.trace_start"() <{level = 10 : i32, message = "qd,kd->qk"}> : () -> ()
    %cst_128 = arith.constant dense<0.000000e+00> : vector<16x16xf32>
    %266 = tpu.matmul %261, %263, %cst_128 {dimension_numbers = #tpu.dot_dimension_numbers<[1], [1], [0], [0], [0, 0, 1, 0], [], []>} : vector<16x8xbf16>, vector<16x8xbf16>, vector<16x16xf32> -> vector<16x16xf32>
    "tpu.trace_stop"() : () -> ()
    %267 = arith.addf %266, %1 : vector<16x16xf32>
    %cst_129 = arith.constant dense<0xFF800000> : vector<16xf32>
    %268 = vector.multi_reduction <maximumf>, %267, %cst_129 [1] : vector<16x16xf32> to vector<16xf32>
    %269 = vector.shape_cast %268 : vector<16xf32> to vector<16x1xf32>
    %270 = vector.broadcast %269 : vector<16x1xf32> to vector<16x16xf32>
    %271 = arith.subf %267, %270 : vector<16x16xf32>
    %272 = math.exp %271 : vector<16x16xf32>
    %cst_130 = arith.constant dense<0.000000e+00> : vector<16xf32>
    %273 = vector.multi_reduction <add>, %272, %cst_130 [1] : vector<16x16xf32> to vector<16xf32>
    %274 = vector.shape_cast %273 : vector<16xf32> to vector<16x1xf32>
    %275 = tpu.reciprocal %274 {approx = true} : vector<16x1xf32> -> vector<16x1xf32>
    %276 = vector.broadcast %275 : vector<16x1xf32> to vector<16x16xf32>
    %277 = arith.mulf %272, %276 : vector<16x16xf32>
    %278 = arith.truncf %277 : vector<16x16xf32> to vector<16x16xbf16>
    %cst_131 = arith.constant dense<0.000000e+00> : vector<16x8xf32>
    %279 = tpu.matmul %278, %265, %cst_131 {dimension_numbers = #tpu.dot_dimension_numbers<[1], [0], [0], [1], [0, 0, 1, 1], [], []>} : vector<16x16xbf16>, vector<16x8xbf16>, vector<16x8xf32> -> vector<16x8xf32>
    %c0_132 = arith.constant 0 : index
    %c16_133 = arith.constant 16 : index
    %280 = vector.load %arg12[%c0_132, %c16_133] : memref<16x32xf32, #tpu.memory_space<vmem>>, vector<16x8xf32>
    tpu.vector_store %arg12[%c0_132, %c16_133], %279 {strides = array<i32>} : memref<16x32xf32, #tpu.memory_space<vmem>>, vector<16x8xf32>,
    %c0_134 = arith.constant 0 : index
    %c24_135 = arith.constant 24 : index
    %281 = vector.load %arg11[%c0_134, %c24_135] : memref<16x96xf32, #tpu.memory_space<vmem>>, vector<16x8xf32>
    %282 = arith.truncf %281 : vector<16x8xf32> to vector<16x8xbf16>
    %c0_136 = arith.constant 0 : index
    %c56_137 = arith.constant 56 : index
    %283 = vector.load %arg11[%c0_136, %c56_137] : memref<16x96xf32, #tpu.memory_space<vmem>>, vector<16x8xf32>
    %284 = arith.truncf %283 : vector<16x8xf32> to vector<16x8xbf16>
    %c0_138 = arith.constant 0 : index
    %c88_139 = arith.constant 88 : index
    %285 = vector.load %arg11[%c0_138, %c88_139] : memref<16x96xf32, #tpu.memory_space<vmem>>, vector<16x8xf32>
    %286 = arith.truncf %285 : vector<16x8xf32> to vector<16x8xbf16>
    "tpu.trace_start"() <{level = 10 : i32, message = "qd,kd->qk"}> : () -> ()
    %cst_140 = arith.constant dense<0.000000e+00> : vector<16x16xf32>
    %287 = tpu.matmul %282, %284, %cst_140 {dimension_numbers = #tpu.dot_dimension_numbers<[1], [1], [0], [0], [0, 0, 1, 0], [], []>} : vector<16x8xbf16>, vector<16x8xbf16>, vector<16x16xf32> -> vector<16x16xf32>
    "tpu.trace_stop"() : () -> ()
    %288 = arith.addf %287, %1 : vector<16x16xf32>
    %cst_141 = arith.constant dense<0xFF800000> : vector<16xf32>
    %289 = vector.multi_reduction <maximumf>, %288, %cst_141 [1] : vector<16x16xf32> to vector<16xf32>
    %290 = vector.shape_cast %289 : vector<16xf32> to vector<16x1xf32>
    %291 = vector.broadcast %290 : vector<16x1xf32> to vector<16x16xf32>
    %292 = arith.subf %288, %291 : vector<16x16xf32>
    %293 = math.exp %292 : vector<16x16xf32>
    %cst_142 = arith.constant dense<0.000000e+00> : vector<16xf32>
    %294 = vector.multi_reduction <add>, %293, %cst_142 [1] : vector<16x16xf32> to vector<16xf32>
    %295 = vector.shape_cast %294 : vector<16xf32> to vector<16x1xf32>
    %296 = tpu.reciprocal %295 {approx = true} : vector<16x1xf32> -> vector<16x1xf32>
    %297 = vector.broadcast %296 : vector<16x1xf32> to vector<16x16xf32>
    %298 = arith.mulf %293, %297 : vector<16x16xf32>
    %299 = arith.truncf %298 : vector<16x16xf32> to vector<16x16xbf16>
    %cst_143 = arith.constant dense<0.000000e+00> : vector<16x8xf32>
    %300 = tpu.matmul %299, %286, %cst_143 {dimension_numbers = #tpu.dot_dimension_numbers<[1], [0], [0], [1], [0, 0, 1, 1], [], []>} : vector<16x16xbf16>, vector<16x8xbf16>, vector<16x8xf32> -> vector<16x8xf32>
    %c0_144 = arith.constant 0 : index
    %c24_145 = arith.constant 24 : index
    %301 = vector.load %arg12[%c0_144, %c24_145] : memref<16x32xf32, #tpu.memory_space<vmem>>, vector<16x8xf32>
    tpu.vector_store %arg12[%c0_144, %c24_145], %300 {strides = array<i32>} : memref<16x32xf32, #tpu.memory_space<vmem>>, vector<16x8xf32>,
    %c0_146 = arith.constant 0 : index
    %c0_147 = arith.constant 0 : index
    %302 = vector.load %arg12[%c0_146, %c0_147] : memref<16x32xf32, #tpu.memory_space<vmem>>, vector<16x32xf32>
    %303 = arith.truncf %302 : vector<16x32xf32> to vector<16x32xbf16>
    %c1_148 = arith.constant 1 : index
    %c0_149 = arith.constant 0 : index
    %c0_150 = arith.constant 0 : index
    %304 = vector.load %arg7[%c1_148, %c0_149, %c0_150] : memref<2x32x32xbf16, #tpu.memory_space<vmem>>, vector<1x32x32xbf16>
    %305 = vector.shape_cast %304 : vector<1x32x32xbf16> to vector<32x32xbf16>
    %cst_151 = arith.constant dense<0.000000e+00> : vector<16x32xf32>
    %306 = tpu.matmul %303, %305, %cst_151 {dimension_numbers = #tpu.dot_dimension_numbers<[1], [0], [0], [1], [0, 0, 1, 1], [], []>} : vector<16x32xbf16>, vector<32x32xbf16>, vector<16x32xf32> -> vector<16x32xf32>
    %307 = vector.extract_strided_slice %184 {offsets = [4, 0], sizes = [1, 32], strides = [1, 1]} : vector<6x32xf32> to vector<1x32xf32>
    %308 = vector.broadcast %307 : vector<1x32xf32> to vector<16x32xf32>
    %309 = arith.addf %306, %308 : vector<16x32xf32>
    %310 = arith.addf %182, %309 : vector<16x32xf32>
    %311 = vector.extract_strided_slice %184 {offsets = [2, 0], sizes = [1, 32], strides = [1, 1]} : vector<6x32xf32> to vector<1x32xf32>
    %312 = vector.extract_strided_slice %184 {offsets = [3, 0], sizes = [1, 32], strides = [1, 1]} : vector<6x32xf32> to vector<1x32xf32>
    %cst_152 = arith.constant dense<0.000000e+00> : vector<16xf32>
    %313 = vector.multi_reduction <add>, %310, %cst_152 [1] : vector<16x32xf32> to vector<16xf32>
    %314 = vector.shape_cast %313 : vector<16xf32> to vector<16x1xf32>
    %cst_153 = arith.constant 3.200000e+01 : f32
    %315 = vector.broadcast %cst_153 : f32 to vector<16x1xf32>
    %316 = arith.divf %314, %315 : vector<16x1xf32>
    %317 = vector.broadcast %316 : vector<16x1xf32> to vector<16x32xf32>
    %318 = arith.subf %310, %317 : vector<16x32xf32>
    %319 = arith.mulf %318, %318 : vector<16x32xf32>
    %cst_154 = arith.constant dense<0.000000e+00> : vector<16xf32>
    %320 = vector.multi_reduction <add>, %319, %cst_154 [1] : vector<16x32xf32> to vector<16xf32>
    %321 = vector.shape_cast %320 : vector<16xf32> to vector<16x1xf32>
    %cst_155 = arith.constant 3.200000e+01 : f32
    %322 = vector.broadcast %cst_155 : f32 to vector<16x1xf32>
    %323 = arith.divf %321, %322 : vector<16x1xf32>
    %324 = vector.broadcast %316 : vector<16x1xf32> to vector<16x32xf32>
    %325 = arith.subf %310, %324 : vector<16x32xf32>
    %cst_156 = arith.constant 9.99999974E-6 : f32
    %326 = vector.broadcast %cst_156 : f32 to vector<16x1xf32>
    %327 = arith.addf %323, %326 : vector<16x1xf32>
    %328 = math.rsqrt %327 : vector<16x1xf32>
    %329 = vector.broadcast %328 : vector<16x1xf32> to vector<16x32xf32>
    %330 = arith.mulf %325, %329 : vector<16x32xf32>
    %331 = vector.broadcast %311 : vector<1x32xf32> to vector<16x32xf32>
    %332 = arith.mulf %330, %331 : vector<16x32xf32>
    %333 = vector.broadcast %312 : vector<1x32xf32> to vector<16x32xf32>
    %334 = arith.addf %332, %333 : vector<16x32xf32>
    %335 = arith.truncf %334 : vector<16x32xf32> to vector<16x32xbf16>
    %c1_157 = arith.constant 1 : index
    %c0_158 = arith.constant 0 : index
    %c0_159 = arith.constant 0 : index
    %336 = vector.load %arg8[%c1_157, %c0_158, %c0_159] : memref<2x32x128xbf16, #tpu.memory_space<vmem>>, vector<1x32x128xbf16>
    %337 = vector.shape_cast %336 : vector<1x32x128xbf16> to vector<32x128xbf16>
    %cst_160 = arith.constant dense<0.000000e+00> : vector<16x128xf32>
    %338 = tpu.matmul %335, %337, %cst_160 {dimension_numbers = #tpu.dot_dimension_numbers<[1], [0], [0], [1], [0, 0, 1, 1], [], []>} : vector<16x32xbf16>, vector<32x128xbf16>, vector<16x128xf32> -> vector<16x128xf32>
    %c1_161 = arith.constant 1 : index
    %c0_162 = arith.constant 0 : index
    %c0_163 = arith.constant 0 : index
    %339 = vector.load %arg4[%c1_161, %c0_162, %c0_163] : memref<2x1x128xf32, #tpu.memory_space<vmem>>, vector<1x1x128xf32>
    %340 = vector.shape_cast %339 : vector<1x1x128xf32> to vector<1x128xf32>
    %341 = vector.broadcast %340 : vector<1x128xf32> to vector<16x128xf32>
    %342 = arith.addf %338, %341 : vector<16x128xf32>
    %cst_164 = arith.constant 5.000000e-01 : f32
    %343 = vector.broadcast %cst_164 : f32 to vector<16x128xf32>
    %344 = arith.mulf %343, %342 : vector<16x128xf32>
    %cst_165 = arith.constant 4.471500e-02 : f32
    %345 = vector.broadcast %cst_165 : f32 to vector<16x128xf32>
    %346 = arith.mulf %345, %342 : vector<16x128xf32>
    %347 = arith.mulf %346, %342 : vector<16x128xf32>
    %348 = arith.mulf %347, %342 : vector<16x128xf32>
    %349 = arith.addf %342, %348 : vector<16x128xf32>
    %cst_166 = arith.constant 0.797884583 : f32
    %350 = vector.broadcast %cst_166 : f32 to vector<16x128xf32>
    %351 = arith.mulf %350, %349 : vector<16x128xf32>
    %352 = math.tanh %351 : vector<16x128xf32>
    %cst_167 = arith.constant 1.000000e+00 : f32
    %353 = vector.broadcast %cst_167 : f32 to vector<16x128xf32>
    %354 = arith.addf %353, %352 : vector<16x128xf32>
    %355 = arith.mulf %344, %354 : vector<16x128xf32>
    %356 = arith.truncf %355 : vector<16x128xf32> to vector<16x128xbf16>
    %c1_168 = arith.constant 1 : index
    %c0_169 = arith.constant 0 : index
    %c0_170 = arith.constant 0 : index
    %357 = vector.load %arg9[%c1_168, %c0_169, %c0_170] : memref<2x128x32xbf16, #tpu.memory_space<vmem>>, vector<1x128x32xbf16>
    %358 = vector.shape_cast %357 : vector<1x128x32xbf16> to vector<128x32xbf16>
    %cst_171 = arith.constant dense<0.000000e+00> : vector<16x32xf32>
    %359 = tpu.matmul %356, %358, %cst_171 {dimension_numbers = #tpu.dot_dimension_numbers<[1], [0], [0], [1], [0, 0, 1, 1], [], []>} : vector<16x128xbf16>, vector<128x32xbf16>, vector<16x32xf32> -> vector<16x32xf32>
    %360 = vector.extract_strided_slice %184 {offsets = [5, 0], sizes = [1, 32], strides = [1, 1]} : vector<6x32xf32> to vector<1x32xf32>
    %361 = vector.broadcast %360 : vector<1x32xf32> to vector<16x32xf32>
    %362 = arith.addf %359, %361 : vector<16x32xf32>
    %363 = arith.addf %310, %362 : vector<16x32xf32>
    %c0_172 = arith.constant 0 : index
    %c0_173 = arith.constant 0 : index
    %364 = vector.load %arg5[%c0_172, %c0_173] : memref<2x32xf32, #tpu.memory_space<vmem>>, vector<1x32xf32>
    %c1_174 = arith.constant 1 : index
    %c0_175 = arith.constant 0 : index
    %365 = vector.load %arg5[%c1_174, %c0_175] : memref<2x32xf32, #tpu.memory_space<vmem>>, vector<1x32xf32>
    %cst_176 = arith.constant dense<0.000000e+00> : vector<16xf32>
    %366 = vector.multi_reduction <add>, %363, %cst_176 [1] : vector<16x32xf32> to vector<16xf32>
    %367 = vector.shape_cast %366 : vector<16xf32> to vector<16x1xf32>
    %cst_177 = arith.constant 3.200000e+01 : f32
    %368 = vector.broadcast %cst_177 : f32 to vector<16x1xf32>
    %369 = arith.divf %367, %368 : vector<16x1xf32>
    %370 = vector.broadcast %369 : vector<16x1xf32> to vector<16x32xf32>
    %371 = arith.subf %363, %370 : vector<16x32xf32>
    %372 = arith.mulf %371, %371 : vector<16x32xf32>
    %cst_178 = arith.constant dense<0.000000e+00> : vector<16xf32>
    %373 = vector.multi_reduction <add>, %372, %cst_178 [1] : vector<16x32xf32> to vector<16xf32>
    %374 = vector.shape_cast %373 : vector<16xf32> to vector<16x1xf32>
    %cst_179 = arith.constant 3.200000e+01 : f32
    %375 = vector.broadcast %cst_179 : f32 to vector<16x1xf32>
    %376 = arith.divf %374, %375 : vector<16x1xf32>
    %377 = vector.broadcast %369 : vector<16x1xf32> to vector<16x32xf32>
    %378 = arith.subf %363, %377 : vector<16x32xf32>
    %cst_180 = arith.constant 9.99999974E-6 : f32
    %379 = vector.broadcast %cst_180 : f32 to vector<16x1xf32>
    %380 = arith.addf %376, %379 : vector<16x1xf32>
    %381 = math.rsqrt %380 : vector<16x1xf32>
    %382 = vector.broadcast %381 : vector<16x1xf32> to vector<16x32xf32>
    %383 = arith.mulf %378, %382 : vector<16x32xf32>
    %384 = vector.broadcast %364 : vector<1x32xf32> to vector<16x32xf32>
    %385 = arith.mulf %383, %384 : vector<16x32xf32>
    %386 = vector.broadcast %365 : vector<1x32xf32> to vector<16x32xf32>
    %387 = arith.addf %385, %386 : vector<16x32xf32>
    %c0_181 = arith.constant 0 : index
    %c0_182 = arith.constant 0 : index
    %388 = vector.load %arg10[%c0_181, %c0_182] : memref<16x32xf32, #tpu.memory_space<vmem>>, vector<16x32xf32>
    tpu.vector_store %arg10[%c0_181, %c0_182], %387 {strides = array<i32>} : memref<16x32xf32, #tpu.memory_space<vmem>>, vector<16x32xf32>,
    return
  }
}

</mosaic_0001>

<llo_original>
// kernel: tpu_custom_call.1
$region0: #{tpu_custom_call.1}
  #allocation0 [shape = 'u32[]', space=smem, size = 0x4, offset = 0x4, fixed_abs, tag = 'smem constant byte address 0x4 - core index']
  #allocation1 [shape = 'u32[144,128]{1,0:T(1,128)}', space=vmem, size = 0x12000, scoped, tag = 'internal scratch']
  #allocation2 [shape = 'f32[16,96]{1,0:T(8,128)}', space=vmem, size = 0x2000, scoped, tag = 'scratch operand']
  #allocation3 [shape = 'f32[16,32]{1,0:T(8,128)}', space=vmem, size = 0x2000, scoped, tag = 'scratch operand']
  %s0 = inlined_call_operand.vmem [shape: f32[16,32], index: 0, kind: input, shape index: {}]
  %s1 = inlined_call_operand.vmem [shape: f32[16,16], index: 1, kind: input, shape index: {}]
  %s2 = inlined_call_operand.vmem [shape: f32[2,6,32], index: 2, kind: input, shape index: {}]
  %s3 = inlined_call_operand.vmem [shape: f32[2,1,96], index: 3, kind: input, shape index: {}]
  %s4 = inlined_call_operand.vmem [shape: f32[2,1,128], index: 4, kind: input, shape index: {}]
  %s5 = inlined_call_operand.vmem [shape: f32[2,32], index: 5, kind: input, shape index: {}]
  %s6 = inlined_call_operand.vmem [shape: bf16[2,32,96], index: 6, kind: input, shape index: {}]
  %s7 = inlined_call_operand.vmem [shape: bf16[2,32,32], index: 7, kind: input, shape index: {}]
  %s8 = inlined_call_operand.vmem [shape: bf16[2,32,128], index: 8, kind: input, shape index: {}]
  %s9 = inlined_call_operand.vmem [shape: bf16[2,128,32], index: 9, kind: input, shape index: {}]
  %s10 = inlined_call_operand.hbm [shape: f32[16,32], index: 10, kind: output, shape index: {}]
  %s11 = sld [smem:[#allocation0]]
  $region50: #{tpu_custom_call.1} parent=0
    _
  %s13 = ssub.s32 1, %s11
  %s14 = scalar_select 0, %s13, %s11
  $region1: #{tpu_custom_call.1} parent=0
    #allocation4 [shape = 'u8[8192]{0}', space=vmem, size = 0x2000, scoped, tag = 'output window, operand 0, single buffered']
    #allocation5 [shape = 's32[1]{0}', space=sflag, size = 0x4, scoped, tag = 'scoped memory for tpu_custom_call.1']
    %15 = vsyncpa [#allocation5], 0
    // Predicated region
    $region2: #{tpu_custom_call.1} parent=1 // pred_check
      _
    $region3: #{tpu_custom_call.1} parent=1 // pred_check_branch
      %17 = sbr.rel (0) target = $region5
    $region4: #{tpu_custom_call.1} parent=1 // pred_region
      _
    $region5: #{tpu_custom_call.1} parent=1 // pred_fallthru
      _
    // Predicated region
    $region6: #{tpu_custom_call.1} parent=1 // pred_check
      _
    $region7: #{tpu_custom_call.1} parent=1 // pred_check_branch
      %19 = sbr.rel (0) target = $region9
    $region8: #{tpu_custom_call.1} parent=1 // pred_region
      _
    $region9: #{tpu_custom_call.1} parent=1 // pred_fallthru
      _
    // Predicated region
    $region10: #{tpu_custom_call.1} parent=1 // pred_check
      _
    $region11: #{tpu_custom_call.1} parent=1 // pred_check_branch
      %21 = sbr.rel (0) target = $region13
    $region12: #{tpu_custom_call.1} parent=1 // pred_region
      _
    $region13: #{tpu_custom_call.1} parent=1 // pred_fallthru
      _
    // Predicated region
    $region14: #{tpu_custom_call.1} parent=1 // pred_check
      _
    $region15: #{tpu_custom_call.1} parent=1 // pred_check_branch
      %23 = sbr.rel (0) target = $region17
    $region16: #{tpu_custom_call.1} parent=1 // pred_region
      _
    $region17: #{tpu_custom_call.1} parent=1 // pred_fallthru
      _
    // Predicated region
    $region18: #{tpu_custom_call.1} parent=1 // pred_check
      _
    $region19: #{tpu_custom_call.1} parent=1 // pred_check_branch
      %25 = sbr.rel (0) target = $region21
    $region20: #{tpu_custom_call.1} parent=1 // pred_region
      _
    $region21: #{tpu_custom_call.1} parent=1 // pred_fallthru
      _
    // Predicated region
    $region22: #{tpu_custom_call.1} parent=1 // pred_check
      _
    $region23: #{tpu_custom_call.1} parent=1 // pred_check_branch
      %27 = sbr.rel (0) target = $region25
    $region24: #{tpu_custom_call.1} parent=1 // pred_region
      _
    $region25: #{tpu_custom_call.1} parent=1 // pred_fallthru
      _
    // Predicated region
    $region26: #{tpu_custom_call.1} parent=1 // pred_check
      _
    $region27: #{tpu_custom_call.1} parent=1 // pred_check_branch
      %29 = sbr.rel (0) target = $region29
    $region28: #{tpu_custom_call.1} parent=1 // pred_region
      _
    $region29: #{tpu_custom_call.1} parent=1 // pred_fallthru
      _
    // Predicated region
    $region30: #{tpu_custom_call.1} parent=1 // pred_check
      _
    $region31: #{tpu_custom_call.1} parent=1 // pred_check_branch
      %31 = sbr.rel (0) target = $region33
    $region32: #{tpu_custom_call.1} parent=1 // pred_region
      _
    $region33: #{tpu_custom_call.1} parent=1 // pred_fallthru
      _
    // Predicated region
    $region34: #{tpu_custom_call.1} parent=1 // pred_check
      _
    $region35: #{tpu_custom_call.1} parent=1 // pred_check_branch
      %33 = sbr.rel (0) target = $region37
    $region36: #{tpu_custom_call.1} parent=1 // pred_region
      _
    $region37: #{tpu_custom_call.1} parent=1 // pred_fallthru
      _
    // Predicated region
    $region38: #{tpu_custom_call.1} parent=1 // pred_check
      _
    $region39: #{tpu_custom_call.1} parent=1 // pred_check_branch
      %35 = sbr.rel (0) target = $region41
    $region40: #{tpu_custom_call.1} parent=1 // pred_region
      _
    $region41: #{tpu_custom_call.1} parent=1 // pred_fallthru
      _
    %v37 = vld [vmem:[%s0] sm:$0xff]
    %v38 = vld [vmem:[%s0 + $0x8] sm:$0xff]
    %v39 = vld [vmem:[%s1] sm:$0xff]
    %v40 = vld [vmem:[%s1 + $0x8] sm:$0xff]
    %v41 = vld [vmem:[%s2] sm:$0x3f]
    %vm42 = vcmask 261120
    %v43 = vsel %vm42, %v37, 0.0
    %44 = vadd.xlane.f32.xlu0 %v43
    %v45 = vpop.xlane.xlu0 %44
    %v46 = vsel %vm42, %v38, 0.0
    %47 = vadd.xlane.f32.xlu0 %v46
    %v48 = vpop.xlane.xlu0 %47
    %v49 = vrcp.pop 32.0
    %v50 = vmul.f32 %v45, %v49
    %v51 = vmul.f32 %v48, %v49
    %v52 = vsub.f32 %v37, %v50
    %v53 = vsub.f32 %v38, %v51
    %v54 = vmul.f32 %v52, %v52
    %v55 = vmul.f32 %v53, %v53
    %v56 = vsel %vm42, %v54, 0.0
    %57 = vadd.xlane.f32.xlu0 %v56
    %v58 = vpop.xlane.xlu0 %57
    %v59 = vsel %vm42, %v55, 0.0
    %60 = vadd.xlane.f32.xlu0 %v59
    %v61 = vpop.xlane.xlu0 %60
    %v62 = vmul.f32 %v58, %v49
    %v63 = vmul.f32 %v61, %v49
    %v64 = vadd.f32 %v62, 1e-05
    %v65 = vadd.f32 %v63, 1e-05
    %v66 = vrsqrt.pop %v64
    %v67 = vrsqrt.pop %v65
    %v68 = vmul.f32 %v52, %v66
    %v69 = vmul.f32 %v53, %v67
    %v70 = vlaneseq
    %v71 = vshrl.u32 %v70, 7
    %v72 = vsub.s32 0, %v71
    %v73 = vrot.slane %v41, %v72
    %v74 = vmul.f32 %v68, %v73
    %v75 = vmul.f32 %v69, %v73
    %v76 = vlaneseq
    %v77 = vshrl.u32 %v76, 7
    %v78 = vsub.s32 1, %v77
    %v79 = vrot.slane %v41, %v78
    %v80 = vadd.f32 %v74, %v79
    %v81 = vadd.f32 %v75, %v79
    %v82 = vpack.c.bf16 %v81, %v80
    %v83 = vld [vmem:[%s6] sm:$0xf]
    %v84 = vld [vmem:[%s6 + $0x4] sm:$0xf]
    %v85 = vld [vmem:[%s6 + $0x8] sm:$0xf]
    %v86 = vld [vmem:[%s6 + $0xc] sm:$0xf]
    %v87 = vld [vmem:[%s3] sm:$0x1]
    %v89 = vlaneseq
    %v90 = vshrl.u32 %v89, 7
    %v91 = vsub.s32 0, %v90
    %v92 = vrot.slane %v87, %v91
    %v98 = vunpack.c.l.b16 %v83
    %v99 = vunpack.c.l.b16 %v84
    %v100 = vunpack.c.l.b16 %v85
    %v101 = vunpack.c.l.b16 %v86
    %v102 = vpack.c.b16 %v99, %v98
    %v103 = vpack.c.b16 %v101, %v100
    %v107 = vsel %vm42, %v82, 0
    %109 = vmatprep.subr.bf16.mxu0 0
    %110 = vmatpush1.bf16.msra.mxu0 0
    %111 = vmatprep.subr.bf16.mxu0 0
    %112 = vmatpush1.bf16.msra.mxu0 0
    %113 = vmatprep.subr.bf16.mxu0 0
    %114 = vmatpush1.bf16.msra.mxu0 0
    %115 = vmatprep.subr.bf16.mxu0 0
    %116 = vmatpush1.bf16.msra.mxu0 0
    %117 = vmatprep.subr.bf16.mxu0 0
    %118 = vmatpush1.bf16.msra.mxu0 0
    %119 = vmatprep.subr.bf16.mxu0 0
    %120 = vmatpush1.bf16.msra.mxu0 0
    %121 = vmatprep.subr.bf16.mxu0 0
    %122 = vmatpush1.bf16.msra.mxu0 %v103
    %123 = vmatprep.subr.bf16.mxu0 0
    %124 = vmatpush1.bf16.msra.mxu0 %v102
    %125 = vmatprep.subr.bf16.mxu0 0
    %126 = vmatpush2.bf16.msra.mxu0 0
    %127 = vmatprep.subr.bf16.mxu0 0
    %128 = vmatpush2.bf16.msra.mxu0 0
    %129 = vmatprep.subr.bf16.mxu0 0
    %130 = vmatpush2.bf16.msra.mxu0 0
    %131 = vmatprep.subr.bf16.mxu0 0
    %132 = vmatpush2.bf16.msra.mxu0 0
    %133 = vmatprep.subr.bf16.mxu0 0
    %134 = vmatpush2.bf16.msra.mxu0 0
    %135 = vmatprep.subr.bf16.mxu0 0
    %136 = vmatpush2.bf16.msra.mxu0 0
    %137 = vmatprep.subr.bf16.mxu0 0
    %138 = vmatpush2.bf16.msra.mxu0 0
    %139 = vmatprep.subr.bf16.mxu0 0
    %140 = vmatpush2.bf16.msra.mxu0 0
    %141 = vmatprep.mubr.bf16.mxu0 0
    %142 = vmatmul.mubr.bf16.gmra.mxu0 %v107
    %v143 = vpop.f32.mrf.mxu0
    %v144 = vadd.f32 %v92, %v143
    %v145 = vpop.f32.mrf.mxu0
    %v146 = vpop.f32.mrf.mxu0
    %v147 = vadd.f32 %v92, %v146
    %v148 = vpop.f32.mrf.mxu0
    %149 = vdwg.mxu0
    %vm150 = vcmask 785408
    %151 = vst.msk [vmem:[#allocation2] sm:$0xff] %vm150, %v144
    %152 = vst.msk [vmem:[#allocation2 + $0x8] sm:$0xff] %vm150, %v147
    %v153 = vld [vmem:[#allocation2] sm:$0xff]
    %v154 = vld [vmem:[#allocation2 + $0x8] sm:$0xff]
    %v155 = vpack.c.bf16 %v154, %v153
    %157 = vrot.lane.b32.xlu0 %v155, 96
    %v158 = vpop.permute.xlu0 %157
    %vm159 = vcmask 64512
    %v161 = vsel %vm159, %v155, 0
    %v164 = vsel %vm159, %v158, 0
    %166 = vmatprep.subr.bf16.mxu0 0
    %167 = vmatpush1.bf16.xpose.msra.mxu0 0
    %168 = vmatprep.subr.bf16.mxu0 0
    %169 = vmatpush1.bf16.xpose.msra.mxu0 0
    %170 = vmatprep.subr.bf16.mxu0 0
    %171 = vmatpush1.bf16.xpose.msra.mxu0 0
    %172 = vmatprep.subr.bf16.mxu0 0
    %173 = vmatpush1.bf16.xpose.msra.mxu0 0
    %174 = vmatprep.subr.bf16.mxu0 0
    %175 = vmatpush1.bf16.xpose.msra.mxu0 0
    %176 = vmatprep.subr.bf16.mxu0 0
    %177 = vmatpush1.bf16.xpose.msra.mxu0 0
    %178 = vmatprep.subr.bf16.mxu0 0
    %179 = vmatpush1.bf16.xpose.msra.mxu0 0
    %180 = vmatprep.subr.bf16.mxu0 0
    %181 = vmatpush1.bf16.xpose.msra.mxu0 %v164
    %182 = vmatprep.subr.bf16.mxu0 0
    %183 = vmatpush2.bf16.xpose.msra.mxu0 0
    %184 = vmatprep.subr.bf16.mxu0 0
    %185 = vmatpush2.bf16.xpose.msra.mxu0 0
    %186 = vmatprep.subr.bf16.mxu0 0
    %187 = vmatpush2.bf16.xpose.msra.mxu0 0
    %188 = vmatprep.subr.bf16.mxu0 0
    %189 = vmatpush2.bf16.xpose.msra.mxu0 0
    %190 = vmatprep.subr.bf16.mxu0 0
    %191 = vmatpush2.bf16.xpose.msra.mxu0 0
    %192 = vmatprep.subr.bf16.mxu0 0
    %193 = vmatpush2.bf16.xpose.msra.mxu0 0
    %194 = vmatprep.subr.bf16.mxu0 0
    %195 = vmatpush2.bf16.xpose.msra.mxu0 0
    %196 = vmatprep.subr.bf16.mxu0 0
    %197 = vmatpush2.bf16.xpose.msra.mxu0 0
    %198 = vmatprep.mubr.bf16.mxu0 0
    %199 = vmatmul.mubr.bf16.gmra.mxu0 %v161
    %v200 = vpop.f32.mrf.mxu0
    %v201 = vadd.f32 %v39, %v200
    %v202 = vpop.f32.mrf.mxu0
    %v203 = vpop.f32.mrf.mxu0
    %v204 = vadd.f32 %v40, %v203
    %v205 = vpop.f32.mrf.mxu0
    %206 = vdwg.mxu0
    %vm207 = vcmask 130048
    %v208 = vsel %vm207, %v201, -inf
    %209 = vmax.xlane.f32.xlu0 %v208
    %v210 = vpop.xlane.xlu0 %209
    %v211 = vsel %vm207, %v204, -inf
    %212 = vmax.xlane.f32.xlu0 %v211
    %v213 = vpop.xlane.xlu0 %212
    %v214 = vsub.f32 %v201, %v210
    %v215 = vsub.f32 %v204, %v213
    %v216 = vmul.f32 %v214, 1.442695
    %v217 = vpow.pop %v216
    %v218 = vmul.f32 %v215, 1.442695
    %v219 = vpow.pop %v218
    %v220 = vsel %vm207, %v217, 0.0
    %221 = vadd.xlane.f32.xlu0 %v220
    %v222 = vpop.xlane.xlu0 %221
    %v223 = vsel %vm207, %v219, 0.0
    %224 = vadd.xlane.f32.xlu0 %v223
    %v225 = vpop.xlane.xlu0 %224
    %v226 = vrcp.pop %v222
    %v227 = vrcp.pop %v225
    %v228 = vmul.f32 %v217, %v226
    %v229 = vmul.f32 %v219, %v227
    %v230 = vpack.c.bf16 %v229, %v228
    %231 = vrot.lane.b32.xlu0 %v155, 64
    %v232 = vpop.permute.xlu0 %231
    %v235 = vsel %vm207, %v230, 0
    %237 = vmatprep.subr.bf16.mxu0 0
    %238 = vmatpush1.bf16.msra.mxu0 0
    %239 = vmatprep.subr.bf16.mxu0 0
    %240 = vmatpush1.bf16.msra.mxu0 0
    %241 = vmatprep.subr.bf16.mxu0 0
    %242 = vmatpush1.bf16.msra.mxu0 0
    %243 = vmatprep.subr.bf16.mxu0 0
    %244 = vmatpush1.bf16.msra.mxu0 0
    %245 = vmatprep.subr.bf16.mxu0 0
    %246 = vmatpush1.bf16.msra.mxu0 0
    %247 = vmatprep.subr.bf16.mxu0 0
    %248 = vmatpush1.bf16.msra.mxu0 0
    %249 = vmatprep.subr.bf16.mxu0 0
    %250 = vmatpush1.bf16.msra.mxu0 0
    %251 = vmatprep.subr.bf16.mxu0 0
    %252 = vmatpush1.bf16.msra.mxu0 %v232
    %253 = vmatprep.subr.bf16.mxu0 0
    %254 = vmatpush2.bf16.msra.mxu0 0
    %255 = vmatprep.subr.bf16.mxu0 0
    %256 = vmatpush2.bf16.msra.mxu0 0
    %257 = vmatprep.subr.bf16.mxu0 0
    %258 = vmatpush2.bf16.msra.mxu0 0
    %259 = vmatprep.subr.bf16.mxu0 0
    %260 = vmatpush2.bf16.msra.mxu0 0
    %261 = vmatprep.subr.bf16.mxu0 0
    %262 = vmatpush2.bf16.msra.mxu0 0
    %263 = vmatprep.subr.bf16.mxu0 0
    %264 = vmatpush2.bf16.msra.mxu0 0
    %265 = vmatprep.subr.bf16.mxu0 0
    %266 = vmatpush2.bf16.msra.mxu0 0
    %267 = vmatprep.subr.bf16.mxu0 0
    %268 = vmatpush2.bf16.msra.mxu0 0
    %269 = vmatprep.mubr.bf16.mxu0 0
    %270 = vmatmul.mubr.bf16.gmra.mxu0 %v235
    %v271 = vpop.f32.mrf.mxu0
    %v272 = vadd.f32 0.0, %v271
    %v273 = vpop.f32.mrf.mxu0
    %v274 = vpop.f32.mrf.mxu0
    %v275 = vadd.f32 0.0, %v274
    %v276 = vpop.f32.mrf.mxu0
    %277 = vdwg.mxu0
    %278 = vst.msk [vmem:[#allocation3] sm:$0xff] %vm159, %v272
    %279 = vst.msk [vmem:[#allocation3 + $0x8] sm:$0xff] %vm159, %v275
    %v280 = vld [vmem:[#allocation2] sm:$0xff]
    %v281 = vld [vmem:[#allocation2 + $0x8] sm:$0xff]
    %v282 = vpack.c.bf16 %v281, %v280
    %284 = vrot.lane.b32.xlu0 %v282, 120
    %v285 = vpop.permute.xlu0 %284
    %286 = vrot.lane.b32.xlu0 %v282, 88
    %v287 = vpop.permute.xlu0 %286
    %v289 = vsel %vm159, %v285, 0
    %v292 = vsel %vm159, %v287, 0
    %294 = vmatprep.subr.bf16.mxu0 0
    %295 = vmatpush1.bf16.xpose.msra.mxu0 0
    %296 = vmatprep.subr.bf16.mxu0 0
    %297 = vmatpush1.bf16.xpose.msra.mxu0 0
    %298 = vmatprep.subr.bf16.mxu0 0
    %299 = vmatpush1.bf16.xpose.msra.mxu0 0
    %300 = vmatprep.subr.bf16.mxu0 0
    %301 = vmatpush1.bf16.xpose.msra.mxu0 0
    %302 = vmatprep.subr.bf16.mxu0 0
    %303 = vmatpush1.bf16.xpose.msra.mxu0 0
    %304 = vmatprep.subr.bf16.mxu0 0
    %305 = vmatpush1.bf16.xpose.msra.mxu0 0
    %306 = vmatprep.subr.bf16.mxu0 0
    %307 = vmatpush1.bf16.xpose.msra.mxu0 0
    %308 = vmatprep.subr.bf16.mxu0 0
    %309 = vmatpush1.bf16.xpose.msra.mxu0 %v292
    %310 = vmatprep.subr.bf16.mxu0 0
    %311 = vmatpush2.bf16.xpose.msra.mxu0 0
    %312 = vmatprep.subr.bf16.mxu0 0
    %313 = vmatpush2.bf16.xpose.msra.mxu0 0
    %314 = vmatprep.subr.bf16.mxu0 0
    %315 = vmatpush2.bf16.xpose.msra.mxu0 0
    %316 = vmatprep.subr.bf16.mxu0 0
    %317 = vmatpush2.bf16.xpose.msra.mxu0 0
    %318 = vmatprep.subr.bf16.mxu0 0
    %319 = vmatpush2.bf16.xpose.msra.mxu0 0
    %320 = vmatprep.subr.bf16.mxu0 0
    %321 = vmatpush2.bf16.xpose.msra.mxu0 0
    %322 = vmatprep.subr.bf16.mxu0 0
    %323 = vmatpush2.bf16.xpose.msra.mxu0 0
    %324 = vmatprep.subr.bf16.mxu0 0
    %325 = vmatpush2.bf16.xpose.msra.mxu0 0
    %326 = vmatprep.mubr.bf16.mxu0 0
    %327 = vmatmul.mubr.bf16.gmra.mxu0 %v289
    %v328 = vpop.f32.mrf.mxu0
    %v329 = vadd.f32 %v39, %v328
    %v330 = vpop.f32.mrf.mxu0
    %v331 = vpop.f32.mrf.mxu0
    %v332 = vadd.f32 %v40, %v331
    %v333 = vpop.f32.mrf.mxu0
    %334 = vdwg.mxu0
    %v335 = vsel %vm207, %v329, -inf
    %336 = vmax.xlane.f32.xlu0 %v335
    %v337 = vpop.xlane.xlu0 %336
    %v338 = vsel %vm207, %v332, -inf
    %339 = vmax.xlane.f32.xlu0 %v338
    %v340 = vpop.xlane.xlu0 %339
    %v341 = vsub.f32 %v329, %v337
    %v342 = vsub.f32 %v332, %v340
    %v343 = vmul.f32 %v341, 1.442695
    %v344 = vpow.pop %v343
    %v345 = vmul.f32 %v342, 1.442695
    %v346 = vpow.pop %v345
    %v347 = vsel %vm207, %v344, 0.0
    %348 = vadd.xlane.f32.xlu0 %v347
    %v349 = vpop.xlane.xlu0 %348
    %v350 = vsel %vm207, %v346, 0.0
    %351 = vadd.xlane.f32.xlu0 %v350
    %v352 = vpop.xlane.xlu0 %351
    %v353 = vrcp.pop %v349
    %v354 = vrcp.pop %v352
    %v355 = vmul.f32 %v344, %v353
    %v356 = vmul.f32 %v346, %v354
    %v357 = vpack.c.bf16 %v356, %v355
    %358 = vrot.lane.b32.xlu0 %v282, 56
    %v359 = vpop.permute.xlu0 %358
    %v362 = vsel %vm207, %v357, 0
    %364 = vmatprep.subr.bf16.mxu0 0
    %365 = vmatpush1.bf16.msra.mxu0 0
    %366 = vmatprep.subr.bf16.mxu0 0
    %367 = vmatpush1.bf16.msra.mxu0 0
    %368 = vmatprep.subr.bf16.mxu0 0
    %369 = vmatpush1.bf16.msra.mxu0 0
    %370 = vmatprep.subr.bf16.mxu0 0
    %371 = vmatpush1.bf16.msra.mxu0 0
    %372 = vmatprep.subr.bf16.mxu0 0
    %373 = vmatpush1.bf16.msra.mxu0 0
    %374 = vmatprep.subr.bf16.mxu0 0
    %375 = vmatpush1.bf16.msra.mxu0 0
    %376 = vmatprep.subr.bf16.mxu0 0
    %377 = vmatpush1.bf16.msra.mxu0 0
    %378 = vmatprep.subr.bf16.mxu0 0
    %379 = vmatpush1.bf16.msra.mxu0 %v359
    %380 = vmatprep.subr.bf16.mxu0 0
    %381 = vmatpush2.bf16.msra.mxu0 0
    %382 = vmatprep.subr.bf16.mxu0 0
    %383 = vmatpush2.bf16.msra.mxu0 0
    %384 = vmatprep.subr.bf16.mxu0 0
    %385 = vmatpush2.bf16.msra.mxu0 0
    %386 = vmatprep.subr.bf16.mxu0 0
    %387 = vmatpush2.bf16.msra.mxu0 0
    %388 = vmatprep.subr.bf16.mxu0 0
    %389 = vmatpush2.bf16.msra.mxu0 0
    %390 = vmatprep.subr.bf16.mxu0 0
    %391 = vmatpush2.bf16.msra.mxu0 0
    %392 = vmatprep.subr.bf16.mxu0 0
    %393 = vmatpush2.bf16.msra.mxu0 0
    %394 = vmatprep.subr.bf16.mxu0 0
    %395 = vmatpush2.bf16.msra.mxu0 0
    %396 = vmatprep.mubr.bf16.mxu0 0
    %397 = vmatmul.mubr.bf16.gmra.mxu0 %v362
    %v398 = vpop.f32.mrf.mxu0
    %v399 = vadd.f32 0.0, %v398
    %v400 = vpop.f32.mrf.mxu0
    %v401 = vpop.f32.mrf.mxu0
    %v402 = vadd.f32 0.0, %v401
    %v403 = vpop.f32.mrf.mxu0
    %404 = vdwg.mxu0
    %407 = vrot.lane.b32.xlu0 %v399, 8
    %v408 = vpop.permute.xlu0 %407
    %409 = vrot.lane.b32.xlu0 %v402, 8
    %v410 = vpop.permute.xlu0 %409
    %vm413 = vcmask 130112
    %414 = vst.msk [vmem:[#allocation3] sm:$0xff] %vm413, %v408
    %415 = vst.msk [vmem:[#allocation3 + $0x8] sm:$0xff] %vm413, %v410
    %v416 = vld [vmem:[#allocation2] sm:$0xff]
    %v417 = vld [vmem:[#allocation2 + $0x8] sm:$0xff]
    %v418 = vpack.c.bf16 %v417, %v416
    %420 = vrot.lane.b32.xlu0 %v418, 112
    %v421 = vpop.permute.xlu0 %420
    %422 = vrot.lane.b32.xlu0 %v418, 80
    %v423 = vpop.permute.xlu0 %422
    %v425 = vsel %vm159, %v421, 0
    %v428 = vsel %vm159, %v423, 0
    %430 = vmatprep.subr.bf16.mxu0 0
    %431 = vmatpush1.bf16.xpose.msra.mxu0 0
    %432 = vmatprep.subr.bf16.mxu0 0
    %433 = vmatpush1.bf16.xpose.msra.mxu0 0
    %434 = vmatprep.subr.bf16.mxu0 0
    %435 = vmatpush1.bf16.xpose.msra.mxu0 0
    %436 = vmatprep.subr.bf16.mxu0 0
    %437 = vmatpush1.bf16.xpose.msra.mxu0 0
    %438 = vmatprep.subr.bf16.mxu0 0
    %439 = vmatpush1.bf16.xpose.msra.mxu0 0
    %440 = vmatprep.subr.bf16.mxu0 0
    %441 = vmatpush1.bf16.xpose.msra.mxu0 0
    %442 = vmatprep.subr.bf16.mxu0 0
    %443 = vmatpush1.bf16.xpose.msra.mxu0 0
    %444 = vmatprep.subr.bf16.mxu0 0
    %445 = vmatpush1.bf16.xpose.msra.mxu0 %v428
    %446 = vmatprep.subr.bf16.mxu0 0
    %447 = vmatpush2.bf16.xpose.msra.mxu0 0
    %448 = vmatprep.subr.bf16.mxu0 0
    %449 = vmatpush2.bf16.xpose.msra.mxu0 0
    %450 = vmatprep.subr.bf16.mxu0 0
    %451 = vmatpush2.bf16.xpose.msra.mxu0 0
    %452 = vmatprep.subr.bf16.mxu0 0
    %453 = vmatpush2.bf16.xpose.msra.mxu0 0
    %454 = vmatprep.subr.bf16.mxu0 0
    %455 = vmatpush2.bf16.xpose.msra.mxu0 0
    %456 = vmatprep.subr.bf16.mxu0 0
    %457 = vmatpush2.bf16.xpose.msra.mxu0 0
    %458 = vmatprep.subr.bf16.mxu0 0
    %459 = vmatpush2.bf16.xpose.msra.mxu0 0
    %460 = vmatprep.subr.bf16.mxu0 0
    %461 = vmatpush2.bf16.xpose.msra.mxu0 0
    %462 = vmatprep.mubr.bf16.mxu0 0
    %463 = vmatmul.mubr.bf16.gmra.mxu0 %v425
    %v464 = vpop.f32.mrf.mxu0
    %v465 = vadd.f32 %v39, %v464
    %v466 = vpop.f32.mrf.mxu0
    %v467 = vpop.f32.mrf.mxu0
    %v468 = vadd.f32 %v40, %v467
    %v469 = vpop.f32.mrf.mxu0
    %470 = vdwg.mxu0
    %v471 = vsel %vm207, %v465, -inf
    %472 = vmax.xlane.f32.xlu0 %v471
    %v473 = vpop.xlane.xlu0 %472
    %v474 = vsel %vm207, %v468, -inf
    %475 = vmax.xlane.f32.xlu0 %v474
    %v476 = vpop.xlane.xlu0 %475
    %v477 = vsub.f32 %v465, %v473
    %v478 = vsub.f32 %v468, %v476
    %v479 = vmul.f32 %v477, 1.442695
    %v480 = vpow.pop %v479
    %v481 = vmul.f32 %v478, 1.442695
    %v482 = vpow.pop %v481
    %v483 = vsel %vm207, %v480, 0.0
    %484 = vadd.xlane.f32.xlu0 %v483
    %v485 = vpop.xlane.xlu0 %484
    %v486 = vsel %vm207, %v482, 0.0
    %487 = vadd.xlane.f32.xlu0 %v486
    %v488 = vpop.xlane.xlu0 %487
    %v489 = vrcp.pop %v485
    %v490 = vrcp.pop %v488
    %v491 = vmul.f32 %v480, %v489
    %v492 = vmul.f32 %v482, %v490
    %v493 = vpack.c.bf16 %v492, %v491
    %494 = vrot.lane.b32.xlu0 %v418, 48
    %v495 = vpop.permute.xlu0 %494
    %v498 = vsel %vm207, %v493, 0
    %500 = vmatprep.subr.bf16.mxu0 0
    %501 = vmatpush1.bf16.msra.mxu0 0
    %502 = vmatprep.subr.bf16.mxu0 0
    %503 = vmatpush1.bf16.msra.mxu0 0
    %504 = vmatprep.subr.bf16.mxu0 0
    %505 = vmatpush1.bf16.msra.mxu0 0
    %506 = vmatprep.subr.bf16.mxu0 0
    %507 = vmatpush1.bf16.msra.mxu0 0
    %508 = vmatprep.subr.bf16.mxu0 0
    %509 = vmatpush1.bf16.msra.mxu0 0
    %510 = vmatprep.subr.bf16.mxu0 0
    %511 = vmatpush1.bf16.msra.mxu0 0
    %512 = vmatprep.subr.bf16.mxu0 0
    %513 = vmatpush1.bf16.msra.mxu0 0
    %514 = vmatprep.subr.bf16.mxu0 0
    %515 = vmatpush1.bf16.msra.mxu0 %v495
    %516 = vmatprep.subr.bf16.mxu0 0
    %517 = vmatpush2.bf16.msra.mxu0 0
    %518 = vmatprep.subr.bf16.mxu0 0
    %519 = vmatpush2.bf16.msra.mxu0 0
    %520 = vmatprep.subr.bf16.mxu0 0
    %521 = vmatpush2.bf16.msra.mxu0 0
    %522 = vmatprep.subr.bf16.mxu0 0
    %523 = vmatpush2.bf16.msra.mxu0 0
    %524 = vmatprep.subr.bf16.mxu0 0
    %525 = vmatpush2.bf16.msra.mxu0 0
    %526 = vmatprep.subr.bf16.mxu0 0
    %527 = vmatpush2.bf16.msra.mxu0 0
    %528 = vmatprep.subr.bf16.mxu0 0
    %529 = vmatpush2.bf16.msra.mxu0 0
    %530 = vmatprep.subr.bf16.mxu0 0
    %531 = vmatpush2.bf16.msra.mxu0 0
    %532 = vmatprep.mubr.bf16.mxu0 0
    %533 = vmatmul.mubr.bf16.gmra.mxu0 %v498
    %v534 = vpop.f32.mrf.mxu0
    %v535 = vadd.f32 0.0, %v534
    %v536 = vpop.f32.mrf.mxu0
    %v537 = vpop.f32.mrf.mxu0
    %v538 = vadd.f32 0.0, %v537
    %v539 = vpop.f32.mrf.mxu0
    %540 = vdwg.mxu0
    %543 = vrot.lane.b32.xlu0 %v535, 16
    %v544 = vpop.permute.xlu0 %543
    %545 = vrot.lane.b32.xlu0 %v538, 16
    %v546 = vpop.permute.xlu0 %545
    %vm549 = vcmask 195712
    %550 = vst.msk [vmem:[#allocation3] sm:$0xff] %vm549, %v544
    %551 = vst.msk [vmem:[#allocation3 + $0x8] sm:$0xff] %vm549, %v546
    %v552 = vld [vmem:[#allocation2] sm:$0xff]
    %v553 = vld [vmem:[#allocation2 + $0x8] sm:$0xff]
    %v554 = vpack.c.bf16 %v553, %v552
    %556 = vrot.lane.b32.xlu0 %v554, 104
    %v557 = vpop.permute.xlu0 %556
    %558 = vrot.lane.b32.xlu0 %v554, 72
    %v559 = vpop.permute.xlu0 %558
    %v561 = vsel %vm159, %v557, 0
    %v564 = vsel %vm159, %v559, 0
    %566 = vmatprep.subr.bf16.mxu0 0
    %567 = vmatpush1.bf16.xpose.msra.mxu0 0
    %568 = vmatprep.subr.bf16.mxu0 0
    %569 = vmatpush1.bf16.xpose.msra.mxu0 0
    %570 = vmatprep.subr.bf16.mxu0 0
    %571 = vmatpush1.bf16.xpose.msra.mxu0 0
    %572 = vmatprep.subr.bf16.mxu0 0
    %573 = vmatpush1.bf16.xpose.msra.mxu0 0
    %574 = vmatprep.subr.bf16.mxu0 0
    %575 = vmatpush1.bf16.xpose.msra.mxu0 0
    %576 = vmatprep.subr.bf16.mxu0 0
    %577 = vmatpush1.bf16.xpose.msra.mxu0 0
    %578 = vmatprep.subr.bf16.mxu0 0
    %579 = vmatpush1.bf16.xpose.msra.mxu0 0
    %580 = vmatprep.subr.bf16.mxu0 0
    %581 = vmatpush1.bf16.xpose.msra.mxu0 %v564
    %582 = vmatprep.subr.bf16.mxu0 0
    %583 = vmatpush2.bf16.xpose.msra.mxu0 0
    %584 = vmatprep.subr.bf16.mxu0 0
    %585 = vmatpush2.bf16.xpose.msra.mxu0 0
    %586 = vmatprep.subr.bf16.mxu0 0
    %587 = vmatpush2.bf16.xpose.msra.mxu0 0
    %588 = vmatprep.subr.bf16.mxu0 0
    %589 = vmatpush2.bf16.xpose.msra.mxu0 0
    %590 = vmatprep.subr.bf16.mxu0 0
    %591 = vmatpush2.bf16.xpose.msra.mxu0 0
    %592 = vmatprep.subr.bf16.mxu0 0
    %593 = vmatpush2.bf16.xpose.msra.mxu0 0
    %594 = vmatprep.subr.bf16.mxu0 0
    %595 = vmatpush2.bf16.xpose.msra.mxu0 0
    %596 = vmatprep.subr.bf16.mxu0 0
    %597 = vmatpush2.bf16.xpose.msra.mxu0 0
    %598 = vmatprep.mubr.bf16.mxu0 0
    %599 = vmatmul.mubr.bf16.gmra.mxu0 %v561
    %v600 = vpop.f32.mrf.mxu0
    %v601 = vadd.f32 %v39, %v600
    %v602 = vpop.f32.mrf.mxu0
    %v603 = vpop.f32.mrf.mxu0
    %v604 = vadd.f32 %v40, %v603
    %v605 = vpop.f32.mrf.mxu0
    %606 = vdwg.mxu0
    %v607 = vsel %vm207, %v601, -inf
    %608 = vmax.xlane.f32.xlu0 %v607
    %v609 = vpop.xlane.xlu0 %608
    %v610 = vsel %vm207, %v604, -inf
    %611 = vmax.xlane.f32.xlu0 %v610
    %v612 = vpop.xlane.xlu0 %611
    %v613 = vsub.f32 %v601, %v609
    %v614 = vsub.f32 %v604, %v612
    %v615 = vmul.f32 %v613, 1.442695
    %v616 = vpow.pop %v615
    %v617 = vmul.f32 %v614, 1.442695
    %v618 = vpow.pop %v617
    %v619 = vsel %vm207, %v616, 0.0
    %620 = vadd.xlane.f32.xlu0 %v619
    %v621 = vpop.xlane.xlu0 %620
    %v622 = vsel %vm207, %v618, 0.0
    %623 = vadd.xlane.f32.xlu0 %v622
    %v624 = vpop.xlane.xlu0 %623
    %v625 = vrcp.pop %v621
    %v626 = vrcp.pop %v624
    %v627 = vmul.f32 %v616, %v625
    %v628 = vmul.f32 %v618, %v626
    %v629 = vpack.c.bf16 %v628, %v627
    %630 = vrot.lane.b32.xlu0 %v554, 40
    %v631 = vpop.permute.xlu0 %630
    %v634 = vsel %vm207, %v629, 0
    %636 = vmatprep.subr.bf16.mxu0 0
    %637 = vmatpush1.bf16.msra.mxu0 0
    %638 = vmatprep.subr.bf16.mxu0 0
    %639 = vmatpush1.bf16.msra.mxu0 0
    %640 = vmatprep.subr.bf16.mxu0 0
    %641 = vmatpush1.bf16.msra.mxu0 0
    %642 = vmatprep.subr.bf16.mxu0 0
    %643 = vmatpush1.bf16.msra.mxu0 0
    %644 = vmatprep.subr.bf16.mxu0 0
    %645 = vmatpush1.bf16.msra.mxu0 0
    %646 = vmatprep.subr.bf16.mxu0 0
    %647 = vmatpush1.bf16.msra.mxu0 0
    %648 = vmatprep.subr.bf16.mxu0 0
    %649 = vmatpush1.bf16.msra.mxu0 0
    %650 = vmatprep.subr.bf16.mxu0 0
    %651 = vmatpush1.bf16.msra.mxu0 %v631
    %652 = vmatprep.subr.bf16.mxu0 0
    %653 = vmatpush2.bf16.msra.mxu0 0
    %654 = vmatprep.subr.bf16.mxu0 0
    %655 = vmatpush2.bf16.msra.mxu0 0
    %656 = vmatprep.subr.bf16.mxu0 0
    %657 = vmatpush2.bf16.msra.mxu0 0
    %658 = vmatprep.subr.bf16.mxu0 0
    %659 = vmatpush2.bf16.msra.mxu0 0
    %660 = vmatprep.subr.bf16.mxu0 0
    %661 = vmatpush2.bf16.msra.mxu0 0
    %662 = vmatprep.subr.bf16.mxu0 0
    %663 = vmatpush2.bf16.msra.mxu0 0
    %664 = vmatprep.subr.bf16.mxu0 0
    %665 = vmatpush2.bf16.msra.mxu0 0
    %666 = vmatprep.subr.bf16.mxu0 0
    %667 = vmatpush2.bf16.msra.mxu0 0
    %668 = vmatprep.mubr.bf16.mxu0 0
    %669 = vmatmul.mubr.bf16.gmra.mxu0 %v634
    %v670 = vpop.f32.mrf.mxu0
    %v671 = vadd.f32 0.0, %v670
    %v672 = vpop.f32.mrf.mxu0
    %v673 = vpop.f32.mrf.mxu0
    %v674 = vadd.f32 0.0, %v673
    %v675 = vpop.f32.mrf.mxu0
    %676 = vdwg.mxu0
    %679 = vrot.lane.b32.xlu0 %v671, 24
    %v680 = vpop.permute.xlu0 %679
    %681 = vrot.lane.b32.xlu0 %v674, 24
    %v682 = vpop.permute.xlu0 %681
    %vm685 = vcmask 261312
    %686 = vst.msk [vmem:[#allocation3] sm:$0xff] %vm685, %v680
    %687 = vst.msk [vmem:[#allocation3 + $0x8] sm:$0xff] %vm685, %v682
    %v688 = vld [vmem:[#allocation3] sm:$0xff]
    %v689 = vld [vmem:[#allocation3 + $0x8] sm:$0xff]
    %v690 = vpack.c.bf16 %v689, %v688
    %v691 = vld [vmem:[%s7] sm:$0xf]
    %v692 = vld [vmem:[%s7 + $0x4] sm:$0xf]
    %v693 = vld [vmem:[%s7 + $0x8] sm:$0xf]
    %v694 = vld [vmem:[%s7 + $0xc] sm:$0xf]
    %v695 = vlaneseq
    %v696 = vshrl.u32 %v695, 7
    %v697 = vsub.s32 4, %v696
    %v698 = vrot.slane %v41, %v697
    %v703 = vunpack.c.l.b16 %v691
    %v704 = vunpack.c.l.b16 %v692
    %v705 = vunpack.c.l.b16 %v693
    %v706 = vunpack.c.l.b16 %v694
    %v707 = vpack.c.b16 %v704, %v703
    %v708 = vpack.c.b16 %v706, %v705
    %v712 = vsel %vm42, %v690, 0
    %714 = vmatprep.subr.bf16.mxu0 0
    %715 = vmatpush1.bf16.msra.mxu0 0
    %716 = vmatprep.subr.bf16.mxu0 0
    %717 = vmatpush1.bf16.msra.mxu0 0
    %718 = vmatprep.subr.bf16.mxu0 0
    %719 = vmatpush1.bf16.msra.mxu0 0
    %720 = vmatprep.subr.bf16.mxu0 0
    %721 = vmatpush1.bf16.msra.mxu0 0
    %722 = vmatprep.subr.bf16.mxu0 0
    %723 = vmatpush1.bf16.msra.mxu0 0
    %724 = vmatprep.subr.bf16.mxu0 0
    %725 = vmatpush1.bf16.msra.mxu0 0
    %726 = vmatprep.subr.bf16.mxu0 0
    %727 = vmatpush1.bf16.msra.mxu0 %v708
    %728 = vmatprep.subr.bf16.mxu0 0
    %729 = vmatpush1.bf16.msra.mxu0 %v707
    %730 = vmatprep.subr.bf16.mxu0 0
    %731 = vmatpush2.bf16.msra.mxu0 0
    %732 = vmatprep.subr.bf16.mxu0 0
    %733 = vmatpush2.bf16.msra.mxu0 0
    %734 = vmatprep.subr.bf16.mxu0 0
    %735 = vmatpush2.bf16.msra.mxu0 0
    %736 = vmatprep.subr.bf16.mxu0 0
    %737 = vmatpush2.bf16.msra.mxu0 0
    %738 = vmatprep.subr.bf16.mxu0 0
    %739 = vmatpush2.bf16.msra.mxu0 0
    %740 = vmatprep.subr.bf16.mxu0 0
    %741 = vmatpush2.bf16.msra.mxu0 0
    %742 = vmatprep.subr.bf16.mxu0 0
    %743 = vmatpush2.bf16.msra.mxu0 0
    %744 = vmatprep.subr.bf16.mxu0 0
    %745 = vmatpush2.bf16.msra.mxu0 0
    %746 = vmatprep.mubr.bf16.mxu0 0
    %747 = vmatmul.mubr.bf16.gmra.mxu0 %v712
    %v748 = vpop.f32.mrf.mxu0
    %v749 = vadd.f32 %v698, %v748
    %v750 = vpop.f32.mrf.mxu0
    %v751 = vpop.f32.mrf.mxu0
    %v752 = vadd.f32 %v698, %v751
    %v753 = vpop.f32.mrf.mxu0
    %754 = vdwg.mxu0
    %v755 = vadd.f32 %v37, %v749
    %v756 = vadd.f32 %v38, %v752
    %v757 = vsel %vm42, %v755, 0.0
    %758 = vadd.xlane.f32.xlu0 %v757
    %v759 = vpop.xlane.xlu0 %758
    %v760 = vsel %vm42, %v756, 0.0
    %761 = vadd.xlane.f32.xlu0 %v760
    %v762 = vpop.xlane.xlu0 %761
    %v763 = vmul.f32 %v759, %v49
    %v764 = vmul.f32 %v762, %v49
    %v765 = vsub.f32 %v755, %v763
    %v766 = vsub.f32 %v756, %v764
    %v767 = vmul.f32 %v765, %v765
    %v768 = vmul.f32 %v766, %v766
    %v769 = vsel %vm42, %v767, 0.0
    %770 = vadd.xlane.f32.xlu0 %v769
    %v771 = vpop.xlane.xlu0 %770
    %v772 = vsel %vm42, %v768, 0.0
    %773 = vadd.xlane.f32.xlu0 %v772
    %v774 = vpop.xlane.xlu0 %773
    %v775 = vmul.f32 %v771, %v49
    %v776 = vmul.f32 %v774, %v49
    %v777 = vadd.f32 %v775, 1e-05
    %v778 = vadd.f32 %v776, 1e-05
    %v779 = vrsqrt.pop %v777
    %v780 = vrsqrt.pop %v778
    %v781 = vmul.f32 %v765, %v779
    %v782 = vmul.f32 %v766, %v780
    %v783 = vlaneseq
    %v784 = vshrl.u32 %v783, 7
    %v785 = vsub.s32 2, %v784
    %v786 = vrot.slane %v41, %v785
    %v787 = vmul.f32 %v781, %v786
    %v788 = vmul.f32 %v782, %v786
    %v789 = vlaneseq
    %v790 = vshrl.u32 %v789, 7
    %v791 = vsub.s32 3, %v790
    %v792 = vrot.slane %v41, %v791
    %v793 = vadd.f32 %v787, %v792
    %v794 = vadd.f32 %v788, %v792
    %v795 = vpack.c.bf16 %v794, %v793
    %v796 = vld [vmem:[%s8] sm:$0xf]
    %v797 = vld [vmem:[%s8 + $0x4] sm:$0xf]
    %v798 = vld [vmem:[%s8 + $0x8] sm:$0xf]
    %v799 = vld [vmem:[%s8 + $0xc] sm:$0xf]
    %v800 = vld [vmem:[%s4] sm:$0x1]
    %v802 = vlaneseq
    %v803 = vshrl.u32 %v802, 7
    %v804 = vsub.s32 0, %v803
    %v805 = vrot.slane %v800, %v804
    %v811 = vunpack.c.l.b16 %v796
    %v812 = vunpack.c.l.b16 %v797
    %v813 = vunpack.c.l.b16 %v798
    %v814 = vunpack.c.l.b16 %v799
    %v815 = vpack.c.b16 %v812, %v811
    %v816 = vpack.c.b16 %v814, %v813
    %v820 = vsel %vm42, %v795, 0
    %822 = vmatprep.subr.bf16.mxu0 0
    %823 = vmatpush1.bf16.msra.mxu0 0
    %824 = vmatprep.subr.bf16.mxu0 0
    %825 = vmatpush1.bf16.msra.mxu0 0
    %826 = vmatprep.subr.bf16.mxu0 0
    %827 = vmatpush1.bf16.msra.mxu0 0
    %828 = vmatprep.subr.bf16.mxu0 0
    %829 = vmatpush1.bf16.msra.mxu0 0
    %830 = vmatprep.subr.bf16.mxu0 0
    %831 = vmatpush1.bf16.msra.mxu0 0
    %832 = vmatprep.subr.bf16.mxu0 0
    %833 = vmatpush1.bf16.msra.mxu0 0
    %834 = vmatprep.subr.bf16.mxu0 0
    %835 = vmatpush1.bf16.msra.mxu0 %v816
    %836 = vmatprep.subr.bf16.mxu0 0
    %837 = vmatpush1.bf16.msra.mxu0 %v815
    %838 = vmatprep.subr.bf16.mxu0 0
    %839 = vmatpush2.bf16.msra.mxu0 0
    %840 = vmatprep.subr.bf16.mxu0 0
    %841 = vmatpush2.bf16.msra.mxu0 0
    %842 = vmatprep.subr.bf16.mxu0 0
    %843 = vmatpush2.bf16.msra.mxu0 0
    %844 = vmatprep.subr.bf16.mxu0 0
    %845 = vmatpush2.bf16.msra.mxu0 0
    %846 = vmatprep.subr.bf16.mxu0 0
    %847 = vmatpush2.bf16.msra.mxu0 0
    %848 = vmatprep.subr.bf16.mxu0 0
    %849 = vmatpush2.bf16.msra.mxu0 0
    %850 = vmatprep.subr.bf16.mxu0 0
    %851 = vmatpush2.bf16.msra.mxu0 0
    %852 = vmatprep.subr.bf16.mxu0 0
    %853 = vmatpush2.bf16.msra.mxu0 0
    %854 = vmatprep.mubr.bf16.mxu0 0
    %855 = vmatmul.mubr.bf16.gmra.mxu0 %v820
    %v856 = vpop.f32.mrf.mxu0
    %v857 = vadd.f32 %v805, %v856
    %v858 = vpop.f32.mrf.mxu0
    %v859 = vpop.f32.mrf.mxu0
    %v860 = vadd.f32 %v805, %v859
    %v861 = vpop.f32.mrf.mxu0
    %862 = vdwg.mxu0
    %v863 = vmul.f32 %v857, 0.5
    %v864 = vmul.f32 %v860, 0.5
    %v865 = vmul.f32 %v857, 0.044715
    %v866 = vmul.f32 %v860, 0.044715
    %v867 = vmul.f32 %v865, %v857
    %v868 = vmul.f32 %v866, %v860
    %v869 = vmul.f32 %v867, %v857
    %v870 = vmul.f32 %v868, %v860
    %v871 = vadd.f32 %v857, %v869
    %v872 = vadd.f32 %v860, %v870
    %v873 = vmul.f32 %v871, 0.7978846
    %v874 = vmul.f32 %v872, 0.7978846
    %v875 = vtanh.pop %v873
    %v876 = vtanh.pop %v874
    %v877 = vadd.f32 %v875, 1.0
    %v878 = vadd.f32 %v876, 1.0
    %v879 = vmul.f32 %v863, %v877
    %v880 = vmul.f32 %v864, %v878
    %v881 = vpack.c.bf16 %v880, %v879
    %v882 = vld [vmem:[%s9] sm:$0xf]
    %v883 = vld [vmem:[%s9 + $0x4] sm:$0xf]
    %v884 = vld [vmem:[%s9 + $0x8] sm:$0xf]
    %v885 = vld [vmem:[%s9 + $0xc] sm:$0xf]
    %v886 = vld [vmem:[%s9 + $0x10] sm:$0xf]
    %v887 = vld [vmem:[%s9 + $0x14] sm:$0xf]
    %v888 = vld [vmem:[%s9 + $0x18] sm:$0xf]
    %v889 = vld [vmem:[%s9 + $0x1c] sm:$0xf]
    %v890 = vld [vmem:[%s9 + $0x20] sm:$0xf]
    %v891 = vld [vmem:[%s9 + $0x24] sm:$0xf]
    %v892 = vld [vmem:[%s9 + $0x28] sm:$0xf]
    %v893 = vld [vmem:[%s9 + $0x2c] sm:$0xf]
    %v894 = vld [vmem:[%s9 + $0x30] sm:$0xf]
    %v895 = vld [vmem:[%s9 + $0x34] sm:$0xf]
    %v896 = vld [vmem:[%s9 + $0x38] sm:$0xf]
    %v897 = vld [vmem:[%s9 + $0x3c] sm:$0xf]
    %v898 = vlaneseq
    %v899 = vshrl.u32 %v898, 7
    %v900 = vsub.s32 5, %v899
    %v901 = vrot.slane %v41, %v900
    %v918 = vunpack.c.l.b16 %v882
    %v919 = vunpack.c.l.b16 %v883
    %v920 = vunpack.c.l.b16 %v884
    %v921 = vunpack.c.l.b16 %v885
    %v922 = vunpack.c.l.b16 %v886
    %v923 = vunpack.c.l.b16 %v887
    %v924 = vunpack.c.l.b16 %v888
    %v925 = vunpack.c.l.b16 %v889
    %v926 = vunpack.c.l.b16 %v890
    %v927 = vunpack.c.l.b16 %v891
    %v928 = vunpack.c.l.b16 %v892
    %v929 = vunpack.c.l.b16 %v893
    %v930 = vunpack.c.l.b16 %v894
    %v931 = vunpack.c.l.b16 %v895
    %v932 = vunpack.c.l.b16 %v896
    %v933 = vunpack.c.l.b16 %v897
    %v934 = vpack.c.b16 %v919, %v918
    %v935 = vpack.c.b16 %v921, %v920
    %v936 = vpack.c.b16 %v923, %v922
    %v937 = vpack.c.b16 %v925, %v924
    %v938 = vpack.c.b16 %v927, %v926
    %v939 = vpack.c.b16 %v929, %v928
    %v940 = vpack.c.b16 %v931, %v930
    %v941 = vpack.c.b16 %v933, %v932
    %950 = vmatprep.subr.bf16.mxu0 0
    %951 = vmatpush1.bf16.msra.mxu0 %v941
    %952 = vmatprep.subr.bf16.mxu0 0
    %953 = vmatpush1.bf16.msra.mxu0 %v940
    %954 = vmatprep.subr.bf16.mxu0 0
    %955 = vmatpush1.bf16.msra.mxu0 %v939
    %956 = vmatprep.subr.bf16.mxu0 0
    %957 = vmatpush1.bf16.msra.mxu0 %v938
    %958 = vmatprep.subr.bf16.mxu0 0
    %959 = vmatpush1.bf16.msra.mxu0 %v937
    %960 = vmatprep.subr.bf16.mxu0 0
    %961 = vmatpush1.bf16.msra.mxu0 %v936
    %962 = vmatprep.subr.bf16.mxu0 0
    %963 = vmatpush1.bf16.msra.mxu0 %v935
    %964 = vmatprep.subr.bf16.mxu0 0
    %965 = vmatpush1.bf16.msra.mxu0 %v934
    %966 = vmatprep.subr.bf16.mxu0 0
    %967 = vmatpush2.bf16.msra.mxu0 0
    %968 = vmatprep.subr.bf16.mxu0 0
    %969 = vmatpush2.bf16.msra.mxu0 0
    %970 = vmatprep.subr.bf16.mxu0 0
    %971 = vmatpush2.bf16.msra.mxu0 0
    %972 = vmatprep.subr.bf16.mxu0 0
    %973 = vmatpush2.bf16.msra.mxu0 0
    %974 = vmatprep.subr.bf16.mxu0 0
    %975 = vmatpush2.bf16.msra.mxu0 0
    %976 = vmatprep.subr.bf16.mxu0 0
    %977 = vmatpush2.bf16.msra.mxu0 0
    %978 = vmatprep.subr.bf16.mxu0 0
    %979 = vmatpush2.bf16.msra.mxu0 0
    %980 = vmatprep.subr.bf16.mxu0 0
    %981 = vmatpush2.bf16.msra.mxu0 0
    %982 = vmatprep.mubr.bf16.mxu0 0
    %983 = vmatmul.mubr.bf16.gmra.mxu0 %v881
    %v984 = vpop.f32.mrf.mxu0
    %v985 = vadd.f32 %v901, %v984
    %v986 = vpop.f32.mrf.mxu0
    %v987 = vpop.f32.mrf.mxu0
    %v988 = vadd.f32 %v901, %v987
    %v989 = vpop.f32.mrf.mxu0
    %990 = vdwg.mxu0
    %v991 = vadd.f32 %v755, %v985
    %v992 = vadd.f32 %v756, %v988
    %s993 = scalar_lea.vmem %s2, 8
    %v994 = vld [vmem:[%s993] sm:$0x3f]
    %v995 = vsel %vm42, %v991, 0.0
    %996 = vadd.xlane.f32.xlu0 %v995
    %v997 = vpop.xlane.xlu0 %996
    %v998 = vsel %vm42, %v992, 0.0
    %999 = vadd.xlane.f32.xlu0 %v998
    %v1000 = vpop.xlane.xlu0 %999
    %v1001 = vmul.f32 %v997, %v49
    %v1002 = vmul.f32 %v1000, %v49
    %v1003 = vsub.f32 %v991, %v1001
    %v1004 = vsub.f32 %v992, %v1002
    %v1005 = vmul.f32 %v1003, %v1003
    %v1006 = vmul.f32 %v1004, %v1004
    %v1007 = vsel %vm42, %v1005, 0.0
    %1008 = vadd.xlane.f32.xlu0 %v1007
    %v1009 = vpop.xlane.xlu0 %1008
    %v1010 = vsel %vm42, %v1006, 0.0
    %1011 = vadd.xlane.f32.xlu0 %v1010
    %v1012 = vpop.xlane.xlu0 %1011
    %v1013 = vmul.f32 %v1009, %v49
    %v1014 = vmul.f32 %v1012, %v49
    %v1015 = vadd.f32 %v1013, 1e-05
    %v1016 = vadd.f32 %v1014, 1e-05
    %v1017 = vrsqrt.pop %v1015
    %v1018 = vrsqrt.pop %v1016
    %v1019 = vmul.f32 %v1003, %v1017
    %v1020 = vmul.f32 %v1004, %v1018
    %v1021 = vlaneseq
    %v1022 = vshrl.u32 %v1021, 7
    %v1023 = vsub.s32 0, %v1022
    %v1024 = vrot.slane %v994, %v1023
    %v1025 = vmul.f32 %v1019, %v1024
    %v1026 = vmul.f32 %v1020, %v1024
    %v1027 = vlaneseq
    %v1028 = vshrl.u32 %v1027, 7
    %v1029 = vsub.s32 1, %v1028
    %v1030 = vrot.slane %v994, %v1029
    %v1031 = vadd.f32 %v1025, %v1030
    %v1032 = vadd.f32 %v1026, %v1030
    %v1033 = vpack.c.bf16 %v1032, %v1031
    %s1034 = scalar_lea.vmem %s6, 16
    %v1035 = vld [vmem:[%s1034] sm:$0xf]
    %v1036 = vld [vmem:[%s1034 + $0x4] sm:$0xf]
    %v1037 = vld [vmem:[%s1034 + $0x8] sm:$0xf]
    %v1038 = vld [vmem:[%s1034 + $0xc] sm:$0xf]
    %s1039 = scalar_lea.vmem %s3, 1
    %v1040 = vld [vmem:[%s1039] sm:$0x1]
    %v1042 = vlaneseq
    %v1043 = vshrl.u32 %v1042, 7
    %v1044 = vsub.s32 0, %v1043
    %v1045 = vrot.slane %v1040, %v1044
    %v1051 = vunpack.c.l.b16 %v1035
    %v1052 = vunpack.c.l.b16 %v1036
    %v1053 = vunpack.c.l.b16 %v1037
    %v1054 = vunpack.c.l.b16 %v1038
    %v1055 = vpack.c.b16 %v1052, %v1051
    %v1056 = vpack.c.b16 %v1054, %v1053
    %v1060 = vsel %vm42, %v1033, 0
    %1062 = vmatprep.subr.bf16.mxu0 0
    %1063 = vmatpush1.bf16.msra.mxu0 0
    %1064 = vmatprep.subr.bf16.mxu0 0
    %1065 = vmatpush1.bf16.msra.mxu0 0
    %1066 = vmatprep.subr.bf16.mxu0 0
    %1067 = vmatpush1.bf16.msra.mxu0 0
    %1068 = vmatprep.subr.bf16.mxu0 0
    %1069 = vmatpush1.bf16.msra.mxu0 0
    %1070 = vmatprep.subr.bf16.mxu0 0
    %1071 = vmatpush1.bf16.msra.mxu0 0
    %1072 = vmatprep.subr.bf16.mxu0 0
    %1073 = vmatpush1.bf16.msra.mxu0 0
    %1074 = vmatprep.subr.bf16.mxu0 0
    %1075 = vmatpush1.bf16.msra.mxu0 %v1056
    %1076 = vmatprep.subr.bf16.mxu0 0
    %1077 = vmatpush1.bf16.msra.mxu0 %v1055
    %1078 = vmatprep.subr.bf16.mxu0 0
    %1079 = vmatpush2.bf16.msra.mxu0 0
    %1080 = vmatprep.subr.bf16.mxu0 0
    %1081 = vmatpush2.bf16.msra.mxu0 0
    %1082 = vmatprep.subr.bf16.mxu0 0
    %1083 = vmatpush2.bf16.msra.mxu0 0
    %1084 = vmatprep.subr.bf16.mxu0 0
    %1085 = vmatpush2.bf16.msra.mxu0 0
    %1086 = vmatprep.subr.bf16.mxu0 0
    %1087 = vmatpush2.bf16.msra.mxu0 0
    %1088 = vmatprep.subr.bf16.mxu0 0
    %1089 = vmatpush2.bf16.msra.mxu0 0
    %1090 = vmatprep.subr.bf16.mxu0 0
    %1091 = vmatpush2.bf16.msra.mxu0 0
    %1092 = vmatprep.subr.bf16.mxu0 0
    %1093 = vmatpush2.bf16.msra.mxu0 0
    %1094 = vmatprep.mubr.bf16.mxu0 0
    %1095 = vmatmul.mubr.bf16.gmra.mxu0 %v1060
    %v1096 = vpop.f32.mrf.mxu0
    %v1097 = vadd.f32 %v1045, %v1096
    %v1098 = vpop.f32.mrf.mxu0
    %v1099 = vpop.f32.mrf.mxu0
    %v1100 = vadd.f32 %v1045, %v1099
    %v1101 = vpop.f32.mrf.mxu0
    %1102 = vdwg.mxu0
    %1103 = vst.msk [vmem:[#allocation2] sm:$0xff] %vm150, %v1097
    %1104 = vst.msk [vmem:[#allocation2 + $0x8] sm:$0xff] %vm150, %v1100
    %v1105 = vld [vmem:[#allocation2] sm:$0xff]
    %v1106 = vld [vmem:[#allocation2 + $0x8] sm:$0xff]
    %v1107 = vpack.c.bf16 %v1106, %v1105
    %1109 = vrot.lane.b32.xlu0 %v1107, 96
    %v1110 = vpop.permute.xlu0 %1109
    %v1112 = vsel %vm159, %v1107, 0
    %v1115 = vsel %vm159, %v1110, 0
    %1117 = vmatprep.subr.bf16.mxu0 0
    %1118 = vmatpush1.bf16.xpose.msra.mxu0 0
    %1119 = vmatprep.subr.bf16.mxu0 0
    %1120 = vmatpush1.bf16.xpose.msra.mxu0 0
    %1121 = vmatprep.subr.bf16.mxu0 0
    %1122 = vmatpush1.bf16.xpose.msra.mxu0 0
    %1123 = vmatprep.subr.bf16.mxu0 0
    %1124 = vmatpush1.bf16.xpose.msra.mxu0 0
    %1125 = vmatprep.subr.bf16.mxu0 0
    %1126 = vmatpush1.bf16.xpose.msra.mxu0 0
    %1127 = vmatprep.subr.bf16.mxu0 0
    %1128 = vmatpush1.bf16.xpose.msra.mxu0 0
    %1129 = vmatprep.subr.bf16.mxu0 0
    %1130 = vmatpush1.bf16.xpose.msra.mxu0 0
    %1131 = vmatprep.subr.bf16.mxu0 0
    %1132 = vmatpush1.bf16.xpose.msra.mxu0 %v1115
    %1133 = vmatprep.subr.bf16.mxu0 0
    %1134 = vmatpush2.bf16.xpose.msra.mxu0 0
    %1135 = vmatprep.subr.bf16.mxu0 0
    %1136 = vmatpush2.bf16.xpose.msra.mxu0 0
    %1137 = vmatprep.subr.bf16.mxu0 0
    %1138 = vmatpush2.bf16.xpose.msra.mxu0 0
    %1139 = vmatprep.subr.bf16.mxu0 0
    %1140 = vmatpush2.bf16.xpose.msra.mxu0 0
    %1141 = vmatprep.subr.bf16.mxu0 0
    %1142 = vmatpush2.bf16.xpose.msra.mxu0 0
    %1143 = vmatprep.subr.bf16.mxu0 0
    %1144 = vmatpush2.bf16.xpose.msra.mxu0 0
    %1145 = vmatprep.subr.bf16.mxu0 0
    %1146 = vmatpush2.bf16.xpose.msra.mxu0 0
    %1147 = vmatprep.subr.bf16.mxu0 0
    %1148 = vmatpush2.bf16.xpose.msra.mxu0 0
    %1149 = vmatprep.mubr.bf16.mxu0 0
    %1150 = vmatmul.mubr.bf16.gmra.mxu0 %v1112
    %v1151 = vpop.f32.mrf.mxu0
    %v1152 = vadd.f32 %v39, %v1151
    %v1153 = vpop.f32.mrf.mxu0
    %v1154 = vpop.f32.mrf.mxu0
    %v1155 = vadd.f32 %v40, %v1154
    %v1156 = vpop.f32.mrf.mxu0
    %1157 = vdwg.mxu0
    %v1158 = vsel %vm207, %v1152, -inf
    %1159 = vmax.xlane.f32.xlu0 %v1158
    %v1160 = vpop.xlane.xlu0 %1159
    %v1161 = vsel %vm207, %v1155, -inf
    %1162 = vmax.xlane.f32.xlu0 %v1161
    %v1163 = vpop.xlane.xlu0 %1162
    %v1164 = vsub.f32 %v1152, %v1160
    %v1165 = vsub.f32 %v1155, %v1163
    %v1166 = vmul.f32 %v1164, 1.442695
    %v1167 = vpow.pop %v1166
    %v1168 = vmul.f32 %v1165, 1.442695
    %v1169 = vpow.pop %v1168
    %v1170 = vsel %vm207, %v1167, 0.0
    %1171 = vadd.xlane.f32.xlu0 %v1170
    %v1172 = vpop.xlane.xlu0 %1171
    %v1173 = vsel %vm207, %v1169, 0.0
    %1174 = vadd.xlane.f32.xlu0 %v1173
    %v1175 = vpop.xlane.xlu0 %1174
    %v1176 = vrcp.pop %v1172
    %v1177 = vrcp.pop %v1175
    %v1178 = vmul.f32 %v1167, %v1176
    %v1179 = vmul.f32 %v1169, %v1177
    %v1180 = vpack.c.bf16 %v1179, %v1178
    %1181 = vrot.lane.b32.xlu0 %v1107, 64
    %v1182 = vpop.permute.xlu0 %1181
    %v1185 = vsel %vm207, %v1180, 0
    %1187 = vmatprep.subr.bf16.mxu0 0
    %1188 = vmatpush1.bf16.msra.mxu0 0
    %1189 = vmatprep.subr.bf16.mxu0 0
    %1190 = vmatpush1.bf16.msra.mxu0 0
    %1191 = vmatprep.subr.bf16.mxu0 0
    %1192 = vmatpush1.bf16.msra.mxu0 0
    %1193 = vmatprep.subr.bf16.mxu0 0
    %1194 = vmatpush1.bf16.msra.mxu0 0
    %1195 = vmatprep.subr.bf16.mxu0 0
    %1196 = vmatpush1.bf16.msra.mxu0 0
    %1197 = vmatprep.subr.bf16.mxu0 0
    %1198 = vmatpush1.bf16.msra.mxu0 0
    %1199 = vmatprep.subr.bf16.mxu0 0
    %1200 = vmatpush1.bf16.msra.mxu0 0
    %1201 = vmatprep.subr.bf16.mxu0 0
    %1202 = vmatpush1.bf16.msra.mxu0 %v1182
    %1203 = vmatprep.subr.bf16.mxu0 0
    %1204 = vmatpush2.bf16.msra.mxu0 0
    %1205 = vmatprep.subr.bf16.mxu0 0
    %1206 = vmatpush2.bf16.msra.mxu0 0
    %1207 = vmatprep.subr.bf16.mxu0 0
    %1208 = vmatpush2.bf16.msra.mxu0 0
    %1209 = vmatprep.subr.bf16.mxu0 0
    %1210 = vmatpush2.bf16.msra.mxu0 0
    %1211 = vmatprep.subr.bf16.mxu0 0
    %1212 = vmatpush2.bf16.msra.mxu0 0
    %1213 = vmatprep.subr.bf16.mxu0 0
    %1214 = vmatpush2.bf16.msra.mxu0 0
    %1215 = vmatprep.subr.bf16.mxu0 0
    %1216 = vmatpush2.bf16.msra.mxu0 0
    %1217 = vmatprep.subr.bf16.mxu0 0
    %1218 = vmatpush2.bf16.msra.mxu0 0
    %1219 = vmatprep.mubr.bf16.mxu0 0
    %1220 = vmatmul.mubr.bf16.gmra.mxu0 %v1185
    %v1221 = vpop.f32.mrf.mxu0
    %v1222 = vadd.f32 0.0, %v1221
    %v1223 = vpop.f32.mrf.mxu0
    %v1224 = vpop.f32.mrf.mxu0
    %v1225 = vadd.f32 0.0, %v1224
    %v1226 = vpop.f32.mrf.mxu0
    %1227 = vdwg.mxu0
    %1228 = vst.msk [vmem:[#allocation3] sm:$0xff] %vm159, %v1222
    %1229 = vst.msk [vmem:[#allocation3 + $0x8] sm:$0xff] %vm159, %v1225
    %v1230 = vld [vmem:[#allocation2] sm:$0xff]
    %v1231 = vld [vmem:[#allocation2 + $0x8] sm:$0xff]
    %v1232 = vpack.c.bf16 %v1231, %v1230
    %1234 = vrot.lane.b32.xlu0 %v1232, 120
    %v1235 = vpop.permute.xlu0 %1234
    %1236 = vrot.lane.b32.xlu0 %v1232, 88
    %v1237 = vpop.permute.xlu0 %1236
    %v1239 = vsel %vm159, %v1235, 0
    %v1242 = vsel %vm159, %v1237, 0
    %1244 = vmatprep.subr.bf16.mxu0 0
    %1245 = vmatpush1.bf16.xpose.msra.mxu0 0
    %1246 = vmatprep.subr.bf16.mxu0 0
    %1247 = vmatpush1.bf16.xpose.msra.mxu0 0
    %1248 = vmatprep.subr.bf16.mxu0 0
    %1249 = vmatpush1.bf16.xpose.msra.mxu0 0
    %1250 = vmatprep.subr.bf16.mxu0 0
    %1251 = vmatpush1.bf16.xpose.msra.mxu0 0
    %1252 = vmatprep.subr.bf16.mxu0 0
    %1253 = vmatpush1.bf16.xpose.msra.mxu0 0
    %1254 = vmatprep.subr.bf16.mxu0 0
    %1255 = vmatpush1.bf16.xpose.msra.mxu0 0
    %1256 = vmatprep.subr.bf16.mxu0 0
    %1257 = vmatpush1.bf16.xpose.msra.mxu0 0
    %1258 = vmatprep.subr.bf16.mxu0 0
    %1259 = vmatpush1.bf16.xpose.msra.mxu0 %v1242
    %1260 = vmatprep.subr.bf16.mxu0 0
    %1261 = vmatpush2.bf16.xpose.msra.mxu0 0
    %1262 = vmatprep.subr.bf16.mxu0 0
    %1263 = vmatpush2.bf16.xpose.msra.mxu0 0
    %1264 = vmatprep.subr.bf16.mxu0 0
    %1265 = vmatpush2.bf16.xpose.msra.mxu0 0
    %1266 = vmatprep.subr.bf16.mxu0 0
    %1267 = vmatpush2.bf16.xpose.msra.mxu0 0
    %1268 = vmatprep.subr.bf16.mxu0 0
    %1269 = vmatpush2.bf16.xpose.msra.mxu0 0
    %1270 = vmatprep.subr.bf16.mxu0 0
    %1271 = vmatpush2.bf16.xpose.msra.mxu0 0
    %1272 = vmatprep.subr.bf16.mxu0 0
    %1273 = vmatpush2.bf16.xpose.msra.mxu0 0
    %1274 = vmatprep.subr.bf16.mxu0 0
    %1275 = vmatpush2.bf16.xpose.msra.mxu0 0
    %1276 = vmatprep.mubr.bf16.mxu0 0
    %1277 = vmatmul.mubr.bf16.gmra.mxu0 %v1239
    %v1278 = vpop.f32.mrf.mxu0
    %v1279 = vadd.f32 %v39, %v1278
    %v1280 = vpop.f32.mrf.mxu0
    %v1281 = vpop.f32.mrf.mxu0
    %v1282 = vadd.f32 %v40, %v1281
    %v1283 = vpop.f32.mrf.mxu0
    %1284 = vdwg.mxu0
    %v1285 = vsel %vm207, %v1279, -inf
    %1286 = vmax.xlane.f32.xlu0 %v1285
    %v1287 = vpop.xlane.xlu0 %1286
    %v1288 = vsel %vm207, %v1282, -inf
    %1289 = vmax.xlane.f32.xlu0 %v1288
    %v1290 = vpop.xlane.xlu0 %1289
    %v1291 = vsub.f32 %v1279, %v1287
    %v1292 = vsub.f32 %v1282, %v1290
    %v1293 = vmul.f32 %v1291, 1.442695
    %v1294 = vpow.pop %v1293
    %v1295 = vmul.f32 %v1292, 1.442695
    %v1296 = vpow.pop %v1295
    %v1297 = vsel %vm207, %v1294, 0.0
    %1298 = vadd.xlane.f32.xlu0 %v1297
    %v1299 = vpop.xlane.xlu0 %1298
    %v1300 = vsel %vm207, %v1296, 0.0
    %1301 = vadd.xlane.f32.xlu0 %v1300
    %v1302 = vpop.xlane.xlu0 %1301
    %v1303 = vrcp.pop %v1299
    %v1304 = vrcp.pop %v1302
    %v1305 = vmul.f32 %v1294, %v1303
    %v1306 = vmul.f32 %v1296, %v1304
    %v1307 = vpack.c.bf16 %v1306, %v1305
    %1308 = vrot.lane.b32.xlu0 %v1232, 56
    %v1309 = vpop.permute.xlu0 %1308
    %v1312 = vsel %vm207, %v1307, 0
    %1314 = vmatprep.subr.bf16.mxu0 0
    %1315 = vmatpush1.bf16.msra.mxu0 0
    %1316 = vmatprep.subr.bf16.mxu0 0
    %1317 = vmatpush1.bf16.msra.mxu0 0
    %1318 = vmatprep.subr.bf16.mxu0 0
    %1319 = vmatpush1.bf16.msra.mxu0 0
    %1320 = vmatprep.subr.bf16.mxu0 0
    %1321 = vmatpush1.bf16.msra.mxu0 0
    %1322 = vmatprep.subr.bf16.mxu0 0
    %1323 = vmatpush1.bf16.msra.mxu0 0
    %1324 = vmatprep.subr.bf16.mxu0 0
    %1325 = vmatpush1.bf16.msra.mxu0 0
    %1326 = vmatprep.subr.bf16.mxu0 0
    %1327 = vmatpush1.bf16.msra.mxu0 0
    %1328 = vmatprep.subr.bf16.mxu0 0
    %1329 = vmatpush1.bf16.msra.mxu0 %v1309
    %1330 = vmatprep.subr.bf16.mxu0 0
    %1331 = vmatpush2.bf16.msra.mxu0 0
    %1332 = vmatprep.subr.bf16.mxu0 0
    %1333 = vmatpush2.bf16.msra.mxu0 0
    %1334 = vmatprep.subr.bf16.mxu0 0
    %1335 = vmatpush2.bf16.msra.mxu0 0
    %1336 = vmatprep.subr.bf16.mxu0 0
    %1337 = vmatpush2.bf16.msra.mxu0 0
    %1338 = vmatprep.subr.bf16.mxu0 0
    %1339 = vmatpush2.bf16.msra.mxu0 0
    %1340 = vmatprep.subr.bf16.mxu0 0
    %1341 = vmatpush2.bf16.msra.mxu0 0
    %1342 = vmatprep.subr.bf16.mxu0 0
    %1343 = vmatpush2.bf16.msra.mxu0 0
    %1344 = vmatprep.subr.bf16.mxu0 0
    %1345 = vmatpush2.bf16.msra.mxu0 0
    %1346 = vmatprep.mubr.bf16.mxu0 0
    %1347 = vmatmul.mubr.bf16.gmra.mxu0 %v1312
    %v1348 = vpop.f32.mrf.mxu0
    %v1349 = vadd.f32 0.0, %v1348
    %v1350 = vpop.f32.mrf.mxu0
    %v1351 = vpop.f32.mrf.mxu0
    %v1352 = vadd.f32 0.0, %v1351
    %v1353 = vpop.f32.mrf.mxu0
    %1354 = vdwg.mxu0
    %1357 = vrot.lane.b32.xlu0 %v1349, 8
    %v1358 = vpop.permute.xlu0 %1357
    %1359 = vrot.lane.b32.xlu0 %v1352, 8
    %v1360 = vpop.permute.xlu0 %1359
    %1363 = vst.msk [vmem:[#allocation3] sm:$0xff] %vm413, %v1358
    %1364 = vst.msk [vmem:[#allocation3 + $0x8] sm:$0xff] %vm413, %v1360
    %v1365 = vld [vmem:[#allocation2] sm:$0xff]
    %v1366 = vld [vmem:[#allocation2 + $0x8] sm:$0xff]
    %v1367 = vpack.c.bf16 %v1366, %v1365
    %1369 = vrot.lane.b32.xlu0 %v1367, 112
    %v1370 = vpop.permute.xlu0 %1369
    %1371 = vrot.lane.b32.xlu0 %v1367, 80
    %v1372 = vpop.permute.xlu0 %1371
    %v1374 = vsel %vm159, %v1370, 0
    %v1377 = vsel %vm159, %v1372, 0
    %1379 = vmatprep.subr.bf16.mxu0 0
    %1380 = vmatpush1.bf16.xpose.msra.mxu0 0
    %1381 = vmatprep.subr.bf16.mxu0 0
    %1382 = vmatpush1.bf16.xpose.msra.mxu0 0
    %1383 = vmatprep.subr.bf16.mxu0 0
    %1384 = vmatpush1.bf16.xpose.msra.mxu0 0
    %1385 = vmatprep.subr.bf16.mxu0 0
    %1386 = vmatpush1.bf16.xpose.msra.mxu0 0
    %1387 = vmatprep.subr.bf16.mxu0 0
    %1388 = vmatpush1.bf16.xpose.msra.mxu0 0
    %1389 = vmatprep.subr.bf16.mxu0 0
    %1390 = vmatpush1.bf16.xpose.msra.mxu0 0
    %1391 = vmatprep.subr.bf16.mxu0 0
    %1392 = vmatpush1.bf16.xpose.msra.mxu0 0
    %1393 = vmatprep.subr.bf16.mxu0 0
    %1394 = vmatpush1.bf16.xpose.msra.mxu0 %v1377
    %1395 = vmatprep.subr.bf16.mxu0 0
    %1396 = vmatpush2.bf16.xpose.msra.mxu0 0
    %1397 = vmatprep.subr.bf16.mxu0 0
    %1398 = vmatpush2.bf16.xpose.msra.mxu0 0
    %1399 = vmatprep.subr.bf16.mxu0 0
    %1400 = vmatpush2.bf16.xpose.msra.mxu0 0
    %1401 = vmatprep.subr.bf16.mxu0 0
    %1402 = vmatpush2.bf16.xpose.msra.mxu0 0
    %1403 = vmatprep.subr.bf16.mxu0 0
    %1404 = vmatpush2.bf16.xpose.msra.mxu0 0
    %1405 = vmatprep.subr.bf16.mxu0 0
    %1406 = vmatpush2.bf16.xpose.msra.mxu0 0
    %1407 = vmatprep.subr.bf16.mxu0 0
    %1408 = vmatpush2.bf16.xpose.msra.mxu0 0
    %1409 = vmatprep.subr.bf16.mxu0 0
    %1410 = vmatpush2.bf16.xpose.msra.mxu0 0
    %1411 = vmatprep.mubr.bf16.mxu0 0
    %1412 = vmatmul.mubr.bf16.gmra.mxu0 %v1374
    %v1413 = vpop.f32.mrf.mxu0
    %v1414 = vadd.f32 %v39, %v1413
    %v1415 = vpop.f32.mrf.mxu0
    %v1416 = vpop.f32.mrf.mxu0
    %v1417 = vadd.f32 %v40, %v1416
    %v1418 = vpop.f32.mrf.mxu0
    %1419 = vdwg.mxu0
    %v1420 = vsel %vm207, %v1414, -inf
    %1421 = vmax.xlane.f32.xlu0 %v1420
    %v1422 = vpop.xlane.xlu0 %1421
    %v1423 = vsel %vm207, %v1417, -inf
    %1424 = vmax.xlane.f32.xlu0 %v1423
    %v1425 = vpop.xlane.xlu0 %1424
    %v1426 = vsub.f32 %v1414, %v1422
    %v1427 = vsub.f32 %v1417, %v1425
    %v1428 = vmul.f32 %v1426, 1.442695
    %v1429 = vpow.pop %v1428
    %v1430 = vmul.f32 %v1427, 1.442695
    %v1431 = vpow.pop %v1430
    %v1432 = vsel %vm207, %v1429, 0.0
    %1433 = vadd.xlane.f32.xlu0 %v1432
    %v1434 = vpop.xlane.xlu0 %1433
    %v1435 = vsel %vm207, %v1431, 0.0
    %1436 = vadd.xlane.f32.xlu0 %v1435
    %v1437 = vpop.xlane.xlu0 %1436
    %v1438 = vrcp.pop %v1434
    %v1439 = vrcp.pop %v1437
    %v1440 = vmul.f32 %v1429, %v1438
    %v1441 = vmul.f32 %v1431, %v1439
    %v1442 = vpack.c.bf16 %v1441, %v1440
    %1443 = vrot.lane.b32.xlu0 %v1367, 48
    %v1444 = vpop.permute.xlu0 %1443
    %v1447 = vsel %vm207, %v1442, 0
    %1449 = vmatprep.subr.bf16.mxu0 0
    %1450 = vmatpush1.bf16.msra.mxu0 0
    %1451 = vmatprep.subr.bf16.mxu0 0
    %1452 = vmatpush1.bf16.msra.mxu0 0
    %1453 = vmatprep.subr.bf16.mxu0 0
    %1454 = vmatpush1.bf16.msra.mxu0 0
    %1455 = vmatprep.subr.bf16.mxu0 0
    %1456 = vmatpush1.bf16.msra.mxu0 0
    %1457 = vmatprep.subr.bf16.mxu0 0
    %1458 = vmatpush1.bf16.msra.mxu0 0
    %1459 = vmatprep.subr.bf16.mxu0 0
    %1460 = vmatpush1.bf16.msra.mxu0 0
    %1461 = vmatprep.subr.bf16.mxu0 0
    %1462 = vmatpush1.bf16.msra.mxu0 0
    %1463 = vmatprep.subr.bf16.mxu0 0
    %1464 = vmatpush1.bf16.msra.mxu0 %v1444
    %1465 = vmatprep.subr.bf16.mxu0 0
    %1466 = vmatpush2.bf16.msra.mxu0 0
    %1467 = vmatprep.subr.bf16.mxu0 0
    %1468 = vmatpush2.bf16.msra.mxu0 0
    %1469 = vmatprep.subr.bf16.mxu0 0
    %1470 = vmatpush2.bf16.msra.mxu0 0
    %1471 = vmatprep.subr.bf16.mxu0 0
    %1472 = vmatpush2.bf16.msra.mxu0 0
    %1473 = vmatprep.subr.bf16.mxu0 0
    %1474 = vmatpush2.bf16.msra.mxu0 0
    %1475 = vmatprep.subr.bf16.mxu0 0
    %1476 = vmatpush2.bf16.msra.mxu0 0
    %1477 = vmatprep.subr.bf16.mxu0 0
    %1478 = vmatpush2.bf16.msra.mxu0 0
    %1479 = vmatprep.subr.bf16.mxu0 0
    %1480 = vmatpush2.bf16.msra.mxu0 0
    %1481 = vmatprep.mubr.bf16.mxu0 0
    %1482 = vmatmul.mubr.bf16.gmra.mxu0 %v1447
    %v1483 = vpop.f32.mrf.mxu0
    %v1484 = vadd.f32 0.0, %v1483
    %v1485 = vpop.f32.mrf.mxu0
    %v1486 = vpop.f32.mrf.mxu0
    %v1487 = vadd.f32 0.0, %v1486
    %v1488 = vpop.f32.mrf.mxu0
    %1489 = vdwg.mxu0
    %1492 = vrot.lane.b32.xlu0 %v1484, 16
    %v1493 = vpop.permute.xlu0 %1492
    %1494 = vrot.lane.b32.xlu0 %v1487, 16
    %v1495 = vpop.permute.xlu0 %1494
    %1498 = vst.msk [vmem:[#allocation3] sm:$0xff] %vm549, %v1493
    %1499 = vst.msk [vmem:[#allocation3 + $0x8] sm:$0xff] %vm549, %v1495
    %v1500 = vld [vmem:[#allocation2] sm:$0xff]
    %v1501 = vld [vmem:[#allocation2 + $0x8] sm:$0xff]
    %v1502 = vpack.c.bf16 %v1501, %v1500
    %1504 = vrot.lane.b32.xlu0 %v1502, 104
    %v1505 = vpop.permute.xlu0 %1504
    %1506 = vrot.lane.b32.xlu0 %v1502, 72
    %v1507 = vpop.permute.xlu0 %1506
    %v1509 = vsel %vm159, %v1505, 0
    %v1512 = vsel %vm159, %v1507, 0
    %1514 = vmatprep.subr.bf16.mxu0 0
    %1515 = vmatpush1.bf16.xpose.msra.mxu0 0
    %1516 = vmatprep.subr.bf16.mxu0 0
    %1517 = vmatpush1.bf16.xpose.msra.mxu0 0
    %1518 = vmatprep.subr.bf16.mxu0 0
    %1519 = vmatpush1.bf16.xpose.msra.mxu0 0
    %1520 = vmatprep.subr.bf16.mxu0 0
    %1521 = vmatpush1.bf16.xpose.msra.mxu0 0
    %1522 = vmatprep.subr.bf16.mxu0 0
    %1523 = vmatpush1.bf16.xpose.msra.mxu0 0
    %1524 = vmatprep.subr.bf16.mxu0 0
    %1525 = vmatpush1.bf16.xpose.msra.mxu0 0
    %1526 = vmatprep.subr.bf16.mxu0 0
    %1527 = vmatpush1.bf16.xpose.msra.mxu0 0
    %1528 = vmatprep.subr.bf16.mxu0 0
    %1529 = vmatpush1.bf16.xpose.msra.mxu0 %v1512
    %1530 = vmatprep.subr.bf16.mxu0 0
    %1531 = vmatpush2.bf16.xpose.msra.mxu0 0
    %1532 = vmatprep.subr.bf16.mxu0 0
    %1533 = vmatpush2.bf16.xpose.msra.mxu0 0
    %1534 = vmatprep.subr.bf16.mxu0 0
    %1535 = vmatpush2.bf16.xpose.msra.mxu0 0
    %1536 = vmatprep.subr.bf16.mxu0 0
    %1537 = vmatpush2.bf16.xpose.msra.mxu0 0
    %1538 = vmatprep.subr.bf16.mxu0 0
    %1539 = vmatpush2.bf16.xpose.msra.mxu0 0
    %1540 = vmatprep.subr.bf16.mxu0 0
    %1541 = vmatpush2.bf16.xpose.msra.mxu0 0
    %1542 = vmatprep.subr.bf16.mxu0 0
    %1543 = vmatpush2.bf16.xpose.msra.mxu0 0
    %1544 = vmatprep.subr.bf16.mxu0 0
    %1545 = vmatpush2.bf16.xpose.msra.mxu0 0
    %1546 = vmatprep.mubr.bf16.mxu0 0
    %1547 = vmatmul.mubr.bf16.gmra.mxu0 %v1509
    %v1548 = vpop.f32.mrf.mxu0
    %v1549 = vadd.f32 %v39, %v1548
    %v1550 = vpop.f32.mrf.mxu0
    %v1551 = vpop.f32.mrf.mxu0
    %v1552 = vadd.f32 %v40, %v1551
    %v1553 = vpop.f32.mrf.mxu0
    %1554 = vdwg.mxu0
    %v1555 = vsel %vm207, %v1549, -inf
    %1556 = vmax.xlane.f32.xlu0 %v1555
    %v1557 = vpop.xlane.xlu0 %1556
    %v1558 = vsel %vm207, %v1552, -inf
    %1559 = vmax.xlane.f32.xlu0 %v1558
    %v1560 = vpop.xlane.xlu0 %1559
    %v1561 = vsub.f32 %v1549, %v1557
    %v1562 = vsub.f32 %v1552, %v1560
    %v1563 = vmul.f32 %v1561, 1.442695
    %v1564 = vpow.pop %v1563
    %v1565 = vmul.f32 %v1562, 1.442695
    %v1566 = vpow.pop %v1565
    %v1567 = vsel %vm207, %v1564, 0.0
    %1568 = vadd.xlane.f32.xlu0 %v1567
    %v1569 = vpop.xlane.xlu0 %1568
    %v1570 = vsel %vm207, %v1566, 0.0
    %1571 = vadd.xlane.f32.xlu0 %v1570
    %v1572 = vpop.xlane.xlu0 %1571
    %v1573 = vrcp.pop %v1569
    %v1574 = vrcp.pop %v1572
    %v1575 = vmul.f32 %v1564, %v1573
    %v1576 = vmul.f32 %v1566, %v1574
    %v1577 = vpack.c.bf16 %v1576, %v1575
    %1578 = vrot.lane.b32.xlu0 %v1502, 40
    %v1579 = vpop.permute.xlu0 %1578
    %v1582 = vsel %vm207, %v1577, 0
    %1584 = vmatprep.subr.bf16.mxu0 0
    %1585 = vmatpush1.bf16.msra.mxu0 0
    %1586 = vmatprep.subr.bf16.mxu0 0
    %1587 = vmatpush1.bf16.msra.mxu0 0
    %1588 = vmatprep.subr.bf16.mxu0 0
    %1589 = vmatpush1.bf16.msra.mxu0 0
    %1590 = vmatprep.subr.bf16.mxu0 0
    %1591 = vmatpush1.bf16.msra.mxu0 0
    %1592 = vmatprep.subr.bf16.mxu0 0
    %1593 = vmatpush1.bf16.msra.mxu0 0
    %1594 = vmatprep.subr.bf16.mxu0 0
    %1595 = vmatpush1.bf16.msra.mxu0 0
    %1596 = vmatprep.subr.bf16.mxu0 0
    %1597 = vmatpush1.bf16.msra.mxu0 0
    %1598 = vmatprep.subr.bf16.mxu0 0
    %1599 = vmatpush1.bf16.msra.mxu0 %v1579
    %1600 = vmatprep.subr.bf16.mxu0 0
    %1601 = vmatpush2.bf16.msra.mxu0 0
    %1602 = vmatprep.subr.bf16.mxu0 0
    %1603 = vmatpush2.bf16.msra.mxu0 0
    %1604 = vmatprep.subr.bf16.mxu0 0
    %1605 = vmatpush2.bf16.msra.mxu0 0
    %1606 = vmatprep.subr.bf16.mxu0 0
    %1607 = vmatpush2.bf16.msra.mxu0 0
    %1608 = vmatprep.subr.bf16.mxu0 0
    %1609 = vmatpush2.bf16.msra.mxu0 0
    %1610 = vmatprep.subr.bf16.mxu0 0
    %1611 = vmatpush2.bf16.msra.mxu0 0
    %1612 = vmatprep.subr.bf16.mxu0 0
    %1613 = vmatpush2.bf16.msra.mxu0 0
    %1614 = vmatprep.subr.bf16.mxu0 0
    %1615 = vmatpush2.bf16.msra.mxu0 0
    %1616 = vmatprep.mubr.bf16.mxu0 0
    %1617 = vmatmul.mubr.bf16.gmra.mxu0 %v1582
    %v1618 = vpop.f32.mrf.mxu0
    %v1619 = vadd.f32 0.0, %v1618
    %v1620 = vpop.f32.mrf.mxu0
    %v1621 = vpop.f32.mrf.mxu0
    %v1622 = vadd.f32 0.0, %v1621
    %v1623 = vpop.f32.mrf.mxu0
    %1624 = vdwg.mxu0
    %1627 = vrot.lane.b32.xlu0 %v1619, 24
    %v1628 = vpop.permute.xlu0 %1627
    %1629 = vrot.lane.b32.xlu0 %v1622, 24
    %v1630 = vpop.permute.xlu0 %1629
    %1633 = vst.msk [vmem:[#allocation3] sm:$0xff] %vm685, %v1628
    %1634 = vst.msk [vmem:[#allocation3 + $0x8] sm:$0xff] %vm685, %v1630
    %v1635 = vld [vmem:[#allocation3] sm:$0xff]
    %v1636 = vld [vmem:[#allocation3 + $0x8] sm:$0xff]
    %v1637 = vpack.c.bf16 %v1636, %v1635
    %s1638 = scalar_lea.vmem %s7, 16
    %v1639 = vld [vmem:[%s1638] sm:$0xf]
    %v1640 = vld [vmem:[%s1638 + $0x4] sm:$0xf]
    %v1641 = vld [vmem:[%s1638 + $0x8] sm:$0xf]
    %v1642 = vld [vmem:[%s1638 + $0xc] sm:$0xf]
    %v1643 = vlaneseq
    %v1644 = vshrl.u32 %v1643, 7
    %v1645 = vsub.s32 4, %v1644
    %v1646 = vrot.slane %v994, %v1645
    %v1651 = vunpack.c.l.b16 %v1639
    %v1652 = vunpack.c.l.b16 %v1640
    %v1653 = vunpack.c.l.b16 %v1641
    %v1654 = vunpack.c.l.b16 %v1642
    %v1655 = vpack.c.b16 %v1652, %v1651
    %v1656 = vpack.c.b16 %v1654, %v1653
    %v1660 = vsel %vm42, %v1637, 0
    %1662 = vmatprep.subr.bf16.mxu0 0
    %1663 = vmatpush1.bf16.msra.mxu0 0
    %1664 = vmatprep.subr.bf16.mxu0 0
    %1665 = vmatpush1.bf16.msra.mxu0 0
    %1666 = vmatprep.subr.bf16.mxu0 0
    %1667 = vmatpush1.bf16.msra.mxu0 0
    %1668 = vmatprep.subr.bf16.mxu0 0
    %1669 = vmatpush1.bf16.msra.mxu0 0
    %1670 = vmatprep.subr.bf16.mxu0 0
    %1671 = vmatpush1.bf16.msra.mxu0 0
    %1672 = vmatprep.subr.bf16.mxu0 0
    %1673 = vmatpush1.bf16.msra.mxu0 0
    %1674 = vmatprep.subr.bf16.mxu0 0
    %1675 = vmatpush1.bf16.msra.mxu0 %v1656
    %1676 = vmatprep.subr.bf16.mxu0 0
    %1677 = vmatpush1.bf16.msra.mxu0 %v1655
    %1678 = vmatprep.subr.bf16.mxu0 0
    %1679 = vmatpush2.bf16.msra.mxu0 0
    %1680 = vmatprep.subr.bf16.mxu0 0
    %1681 = vmatpush2.bf16.msra.mxu0 0
    %1682 = vmatprep.subr.bf16.mxu0 0
    %1683 = vmatpush2.bf16.msra.mxu0 0
    %1684 = vmatprep.subr.bf16.mxu0 0
    %1685 = vmatpush2.bf16.msra.mxu0 0
    %1686 = vmatprep.subr.bf16.mxu0 0
    %1687 = vmatpush2.bf16.msra.mxu0 0
    %1688 = vmatprep.subr.bf16.mxu0 0
    %1689 = vmatpush2.bf16.msra.mxu0 0
    %1690 = vmatprep.subr.bf16.mxu0 0
    %1691 = vmatpush2.bf16.msra.mxu0 0
    %1692 = vmatprep.subr.bf16.mxu0 0
    %1693 = vmatpush2.bf16.msra.mxu0 0
    %1694 = vmatprep.mubr.bf16.mxu0 0
    %1695 = vmatmul.mubr.bf16.gmra.mxu0 %v1660
    %v1696 = vpop.f32.mrf.mxu0
    %v1697 = vadd.f32 %v1646, %v1696
    %v1698 = vpop.f32.mrf.mxu0
    %v1699 = vpop.f32.mrf.mxu0
    %v1700 = vadd.f32 %v1646, %v1699
    %v1701 = vpop.f32.mrf.mxu0
    %1702 = vdwg.mxu0
    %v1703 = vadd.f32 %v991, %v1697
    %v1704 = vadd.f32 %v992, %v1700
    %v1705 = vsel %vm42, %v1703, 0.0
    %1706 = vadd.xlane.f32.xlu0 %v1705
    %v1707 = vpop.xlane.xlu0 %1706
    %v1708 = vsel %vm42, %v1704, 0.0
    %1709 = vadd.xlane.f32.xlu0 %v1708
    %v1710 = vpop.xlane.xlu0 %1709
    %v1711 = vmul.f32 %v1707, %v49
    %v1712 = vmul.f32 %v1710, %v49
    %v1713 = vsub.f32 %v1703, %v1711
    %v1714 = vsub.f32 %v1704, %v1712
    %v1715 = vmul.f32 %v1713, %v1713
    %v1716 = vmul.f32 %v1714, %v1714
    %v1717 = vsel %vm42, %v1715, 0.0
    %1718 = vadd.xlane.f32.xlu0 %v1717
    %v1719 = vpop.xlane.xlu0 %1718
    %v1720 = vsel %vm42, %v1716, 0.0
    %1721 = vadd.xlane.f32.xlu0 %v1720
    %v1722 = vpop.xlane.xlu0 %1721
    %v1723 = vmul.f32 %v1719, %v49
    %v1724 = vmul.f32 %v1722, %v49
    %v1725 = vadd.f32 %v1723, 1e-05
    %v1726 = vadd.f32 %v1724, 1e-05
    %v1727 = vrsqrt.pop %v1725
    %v1728 = vrsqrt.pop %v1726
    %v1729 = vmul.f32 %v1713, %v1727
    %v1730 = vmul.f32 %v1714, %v1728
    %v1731 = vlaneseq
    %v1732 = vshrl.u32 %v1731, 7
    %v1733 = vsub.s32 2, %v1732
    %v1734 = vrot.slane %v994, %v1733
    %v1735 = vmul.f32 %v1729, %v1734
    %v1736 = vmul.f32 %v1730, %v1734
    %v1737 = vlaneseq
    %v1738 = vshrl.u32 %v1737, 7
    %v1739 = vsub.s32 3, %v1738
    %v1740 = vrot.slane %v994, %v1739
    %v1741 = vadd.f32 %v1735, %v1740
    %v1742 = vadd.f32 %v1736, %v1740
    %v1743 = vpack.c.bf16 %v1742, %v1741
    %s1744 = scalar_lea.vmem %s8, 16
    %v1745 = vld [vmem:[%s1744] sm:$0xf]
    %v1746 = vld [vmem:[%s1744 + $0x4] sm:$0xf]
    %v1747 = vld [vmem:[%s1744 + $0x8] sm:$0xf]
    %v1748 = vld [vmem:[%s1744 + $0xc] sm:$0xf]
    %s1749 = scalar_lea.vmem %s4, 1
    %v1750 = vld [vmem:[%s1749] sm:$0x1]
    %v1752 = vlaneseq
    %v1753 = vshrl.u32 %v1752, 7
    %v1754 = vsub.s32 0, %v1753
    %v1755 = vrot.slane %v1750, %v1754
    %v1761 = vunpack.c.l.b16 %v1745
    %v1762 = vunpack.c.l.b16 %v1746
    %v1763 = vunpack.c.l.b16 %v1747
    %v1764 = vunpack.c.l.b16 %v1748
    %v1765 = vpack.c.b16 %v1762, %v1761
    %v1766 = vpack.c.b16 %v1764, %v1763
    %v1770 = vsel %vm42, %v1743, 0
    %1772 = vmatprep.subr.bf16.mxu0 0
    %1773 = vmatpush1.bf16.msra.mxu0 0
    %1774 = vmatprep.subr.bf16.mxu0 0
    %1775 = vmatpush1.bf16.msra.mxu0 0
    %1776 = vmatprep.subr.bf16.mxu0 0
    %1777 = vmatpush1.bf16.msra.mxu0 0
    %1778 = vmatprep.subr.bf16.mxu0 0
    %1779 = vmatpush1.bf16.msra.mxu0 0
    %1780 = vmatprep.subr.bf16.mxu0 0
    %1781 = vmatpush1.bf16.msra.mxu0 0
    %1782 = vmatprep.subr.bf16.mxu0 0
    %1783 = vmatpush1.bf16.msra.mxu0 0
    %1784 = vmatprep.subr.bf16.mxu0 0
    %1785 = vmatpush1.bf16.msra.mxu0 %v1766
    %1786 = vmatprep.subr.bf16.mxu0 0
    %1787 = vmatpush1.bf16.msra.mxu0 %v1765
    %1788 = vmatprep.subr.bf16.mxu0 0
    %1789 = vmatpush2.bf16.msra.mxu0 0
    %1790 = vmatprep.subr.bf16.mxu0 0
    %1791 = vmatpush2.bf16.msra.mxu0 0
    %1792 = vmatprep.subr.bf16.mxu0 0
    %1793 = vmatpush2.bf16.msra.mxu0 0
    %1794 = vmatprep.subr.bf16.mxu0 0
    %1795 = vmatpush2.bf16.msra.mxu0 0
    %1796 = vmatprep.subr.bf16.mxu0 0
    %1797 = vmatpush2.bf16.msra.mxu0 0
    %1798 = vmatprep.subr.bf16.mxu0 0
    %1799 = vmatpush2.bf16.msra.mxu0 0
    %1800 = vmatprep.subr.bf16.mxu0 0
    %1801 = vmatpush2.bf16.msra.mxu0 0
    %1802 = vmatprep.subr.bf16.mxu0 0
    %1803 = vmatpush2.bf16.msra.mxu0 0
    %1804 = vmatprep.mubr.bf16.mxu0 0
    %1805 = vmatmul.mubr.bf16.gmra.mxu0 %v1770
    %v1806 = vpop.f32.mrf.mxu0
    %v1807 = vadd.f32 %v1755, %v1806
    %v1808 = vpop.f32.mrf.mxu0
    %v1809 = vpop.f32.mrf.mxu0
    %v1810 = vadd.f32 %v1755, %v1809
    %v1811 = vpop.f32.mrf.mxu0
    %1812 = vdwg.mxu0
    %v1813 = vmul.f32 %v1807, 0.5
    %v1814 = vmul.f32 %v1810, 0.5
    %v1815 = vmul.f32 %v1807, 0.044715
    %v1816 = vmul.f32 %v1810, 0.044715
    %v1817 = vmul.f32 %v1815, %v1807
    %v1818 = vmul.f32 %v1816, %v1810
    %v1819 = vmul.f32 %v1817, %v1807
    %v1820 = vmul.f32 %v1818, %v1810
    %v1821 = vadd.f32 %v1807, %v1819
    %v1822 = vadd.f32 %v1810, %v1820
    %v1823 = vmul.f32 %v1821, 0.7978846
    %v1824 = vmul.f32 %v1822, 0.7978846
    %v1825 = vtanh.pop %v1823
    %v1826 = vtanh.pop %v1824
    %v1827 = vadd.f32 %v1825, 1.0
    %v1828 = vadd.f32 %v1826, 1.0
    %v1829 = vmul.f32 %v1813, %v1827
    %v1830 = vmul.f32 %v1814, %v1828
    %v1831 = vpack.c.bf16 %v1830, %v1829
    %s1832 = scalar_lea.vmem %s9, 64
    %v1833 = vld [vmem:[%s1832] sm:$0xf]
    %v1834 = vld [vmem:[%s1832 + $0x4] sm:$0xf]
    %v1835 = vld [vmem:[%s1832 + $0x8] sm:$0xf]
    %v1836 = vld [vmem:[%s1832 + $0xc] sm:$0xf]
    %v1837 = vld [vmem:[%s1832 + $0x10] sm:$0xf]
    %v1838 = vld [vmem:[%s1832 + $0x14] sm:$0xf]
    %v1839 = vld [vmem:[%s1832 + $0x18] sm:$0xf]
    %v1840 = vld [vmem:[%s1832 + $0x1c] sm:$0xf]
    %v1841 = vld [vmem:[%s1832 + $0x20] sm:$0xf]
    %v1842 = vld [vmem:[%s1832 + $0x24] sm:$0xf]
    %v1843 = vld [vmem:[%s1832 + $0x28] sm:$0xf]
    %v1844 = vld [vmem:[%s1832 + $0x2c] sm:$0xf]
    %v1845 = vld [vmem:[%s1832 + $0x30] sm:$0xf]
    %v1846 = vld [vmem:[%s1832 + $0x34] sm:$0xf]
    %v1847 = vld [vmem:[%s1832 + $0x38] sm:$0xf]
    %v1848 = vld [vmem:[%s1832 + $0x3c] sm:$0xf]
    %v1849 = vlaneseq
    %v1850 = vshrl.u32 %v1849, 7
    %v1851 = vsub.s32 5, %v1850
    %v1852 = vrot.slane %v994, %v1851
    %v1869 = vunpack.c.l.b16 %v1833
    %v1870 = vunpack.c.l.b16 %v1834
    %v1871 = vunpack.c.l.b16 %v1835
    %v1872 = vunpack.c.l.b16 %v1836
    %v1873 = vunpack.c.l.b16 %v1837
    %v1874 = vunpack.c.l.b16 %v1838
    %v1875 = vunpack.c.l.b16 %v1839
    %v1876 = vunpack.c.l.b16 %v1840
    %v1877 = vunpack.c.l.b16 %v1841
    %v1878 = vunpack.c.l.b16 %v1842
    %v1879 = vunpack.c.l.b16 %v1843
    %v1880 = vunpack.c.l.b16 %v1844
    %v1881 = vunpack.c.l.b16 %v1845
    %v1882 = vunpack.c.l.b16 %v1846
    %v1883 = vunpack.c.l.b16 %v1847
    %v1884 = vunpack.c.l.b16 %v1848
    %v1885 = vpack.c.b16 %v1870, %v1869
    %v1886 = vpack.c.b16 %v1872, %v1871
    %v1887 = vpack.c.b16 %v1874, %v1873
    %v1888 = vpack.c.b16 %v1876, %v1875
    %v1889 = vpack.c.b16 %v1878, %v1877
    %v1890 = vpack.c.b16 %v1880, %v1879
    %v1891 = vpack.c.b16 %v1882, %v1881
    %v1892 = vpack.c.b16 %v1884, %v1883
    %1901 = vmatprep.subr.bf16.mxu0 0
    %1902 = vmatpush1.bf16.msra.mxu0 %v1892
    %1903 = vmatprep.subr.bf16.mxu0 0
    %1904 = vmatpush1.bf16.msra.mxu0 %v1891
    %1905 = vmatprep.subr.bf16.mxu0 0
    %1906 = vmatpush1.bf16.msra.mxu0 %v1890
    %1907 = vmatprep.subr.bf16.mxu0 0
    %1908 = vmatpush1.bf16.msra.mxu0 %v1889
    %1909 = vmatprep.subr.bf16.mxu0 0
    %1910 = vmatpush1.bf16.msra.mxu0 %v1888
    %1911 = vmatprep.subr.bf16.mxu0 0
    %1912 = vmatpush1.bf16.msra.mxu0 %v1887
    %1913 = vmatprep.subr.bf16.mxu0 0
    %1914 = vmatpush1.bf16.msra.mxu0 %v1886
    %1915 = vmatprep.subr.bf16.mxu0 0
    %1916 = vmatpush1.bf16.msra.mxu0 %v1885
    %1917 = vmatprep.subr.bf16.mxu0 0
    %1918 = vmatpush2.bf16.msra.mxu0 0
    %1919 = vmatprep.subr.bf16.mxu0 0
    %1920 = vmatpush2.bf16.msra.mxu0 0
    %1921 = vmatprep.subr.bf16.mxu0 0
    %1922 = vmatpush2.bf16.msra.mxu0 0
    %1923 = vmatprep.subr.bf16.mxu0 0
    %1924 = vmatpush2.bf16.msra.mxu0 0
    %1925 = vmatprep.subr.bf16.mxu0 0
    %1926 = vmatpush2.bf16.msra.mxu0 0
    %1927 = vmatprep.subr.bf16.mxu0 0
    %1928 = vmatpush2.bf16.msra.mxu0 0
    %1929 = vmatprep.subr.bf16.mxu0 0
    %1930 = vmatpush2.bf16.msra.mxu0 0
    %1931 = vmatprep.subr.bf16.mxu0 0
    %1932 = vmatpush2.bf16.msra.mxu0 0
    %1933 = vmatprep.mubr.bf16.mxu0 0
    %1934 = vmatmul.mubr.bf16.gmra.mxu0 %v1831
    %v1935 = vpop.f32.mrf.mxu0
    %v1936 = vadd.f32 %v1852, %v1935
    %v1937 = vpop.f32.mrf.mxu0
    %v1938 = vpop.f32.mrf.mxu0
    %v1939 = vadd.f32 %v1852, %v1938
    %v1940 = vpop.f32.mrf.mxu0
    %1941 = vdwg.mxu0
    %v1942 = vadd.f32 %v1703, %v1936
    %v1943 = vadd.f32 %v1704, %v1939
    %v1944 = vld [vmem:[%s5] sm:$0x1]
    %v1945 = vld [vmem:[%s5 + $0x1] sm:$0x1]
    %v1946 = vsel %vm42, %v1942, 0.0
    %1947 = vadd.xlane.f32.xlu0 %v1946
    %v1948 = vpop.xlane.xlu0 %1947
    %v1949 = vsel %vm42, %v1943, 0.0
    %1950 = vadd.xlane.f32.xlu0 %v1949
    %v1951 = vpop.xlane.xlu0 %1950
    %v1952 = vmul.f32 %v1948, %v49
    %v1953 = vmul.f32 %v1951, %v49
    %v1954 = vsub.f32 %v1942, %v1952
    %v1955 = vsub.f32 %v1943, %v1953
    %v1956 = vmul.f32 %v1954, %v1954
    %v1957 = vmul.f32 %v1955, %v1955
    %v1958 = vsel %vm42, %v1956, 0.0
    %1959 = vadd.xlane.f32.xlu0 %v1958
    %v1960 = vpop.xlane.xlu0 %1959
    %v1961 = vsel %vm42, %v1957, 0.0
    %1962 = vadd.xlane.f32.xlu0 %v1961
    %v1963 = vpop.xlane.xlu0 %1962
    %v1964 = vmul.f32 %v1960, %v49
    %v1965 = vmul.f32 %v1963, %v49
    %v1966 = vadd.f32 %v1964, 1e-05
    %v1967 = vadd.f32 %v1965, 1e-05
    %v1968 = vrsqrt.pop %v1966
    %v1969 = vrsqrt.pop %v1967
    %v1970 = vmul.f32 %v1954, %v1968
    %v1971 = vmul.f32 %v1955, %v1969
    %v1972 = vlaneseq
    %v1973 = vshrl.u32 %v1972, 7
    %v1974 = vsub.s32 0, %v1973
    %v1975 = vrot.slane %v1944, %v1974
    %v1976 = vmul.f32 %v1970, %v1975
    %v1977 = vmul.f32 %v1971, %v1975
    %v1978 = vlaneseq
    %v1979 = vshrl.u32 %v1978, 7
    %v1980 = vsub.s32 0, %v1979
    %v1981 = vrot.slane %v1945, %v1980
    %v1982 = vadd.f32 %v1976, %v1981
    %v1983 = vadd.f32 %v1977, %v1981
    %1984 = vst.msk [vmem:[#allocation4] sm:$0xff] %vm42, %v1982
    %1985 = vst.msk [vmem:[#allocation4 + $0x8] sm:$0xff] %vm42, %v1983
    // Predicated region
    $region42: #{tpu_custom_call.1} parent=1 // pred_check
      _
    $region43: #{tpu_custom_call.1} parent=1 // pred_check_branch
      %1987 = sbr.rel (0) target = $region45
    $region44: #{tpu_custom_call.1} parent=1 // pred_region
      %s1989 = ssub.s32 256, 256
      %1990 = vsyncadd [#allocation5], %s1989
      %s1991 = sshll.u32 [#allocation4], 4
      %s1992 = int_to_ptr.vmem [resolvable:$true] %s1991
      %1997 = dma.vmem_to_hbm [thread:$0]  %s1992, 256, %s10, [#allocation5], 128, 128, 8
    $region45: #{tpu_custom_call.1} parent=1 // pred_fallthru
      _
    // Predicated region
    $region46: #{tpu_custom_call.1} parent=1 // pred_check
      _
    $region47: #{tpu_custom_call.1} parent=1 // pred_check_branch
      %1999 = sbr.rel (0) target = $region49
    $region48: #{tpu_custom_call.1} parent=1 // pred_region
      %2000 = dma.done [#allocation5], 256
    $region49: #{tpu_custom_call.1} parent=1 // pred_fallthru
      _
    %2001 = vsyncpa [#allocation5], 1

</llo_original>
